<compile_context>
chip_gen: v6e
topology: v6e:2x2x1
jax: 0.10.0
libtpu: 0.0.40
codegen_flags: <defaults>
</compile_context>

<pallas_src>
import jax
import jax.numpy as jnp
from jax import lax
from jax.experimental import pallas as pl
from jax.experimental.pallas import tpu as pltpu

EPS = 1e-5
_SUBLANE = 8


def _tap_stack(a):
    """a: (C, L) -> (3C, L) = [x[:, l-1]; x[:, l]; x[:, l+1]] with zero 'same' padding."""
    c, l = a.shape
    zero = jnp.zeros((c, 1), a.dtype)
    a_pad = jnp.concatenate([zero, a, zero], axis=1)            # (C, L+2)
    return jnp.concatenate(
        [a_pad[:, 0:l], a_pad[:, 1:l + 1], a_pad[:, 2:l + 2]], axis=0)


def _stats_kernel(x_ref, w1_ref, sum_ref, ssq_ref):
    """Pass 1: bias-free conv1 + per-sample per-channel sum / sum-of-squares."""
    x = x_ref[0]                                                # (Cin_p, L)
    y = jnp.dot(w1_ref[...], _tap_stack(x),
                preferred_element_type=jnp.float32)             # (64, L)
    sum_ref[0] = jnp.sum(y, axis=1, keepdims=True)              # (64, 1)
    ssq_ref[0] = jnp.sum(y * y, axis=1, keepdims=True)          # (64, 1)


def _fused_kernel(x_ref, w1_ref, scale_ref, shift_ref,
                  w2_ref, b2_ref, w3_ref, b3_ref, o_ref):
    """Pass 2: conv1 -> BN(folded scale/shift) -> ReLU -> conv2 -> ReLU -> conv3."""
    x = x_ref[0]                                                # (Cin_p, L)

    # Conv1d(Cin -> 64); bias omitted (cancels exactly in training-mode BatchNorm).
    h = jnp.dot(w1_ref[...], _tap_stack(x),
                preferred_element_type=jnp.float32)             # (64, L)
    # BatchNorm (batch stats folded into per-channel scale/shift) + ReLU.
    h = jnp.maximum(h * scale_ref[...] + shift_ref[...], 0.0)

    # Conv1d(64 -> 32) + ReLU.
    h = jnp.dot(w2_ref[...], _tap_stack(h),
                preferred_element_type=jnp.float32) + b2_ref[...]
    h = jnp.maximum(h, 0.0)

    # Conv1d(32 -> Cout).
    o_ref[0] = (jnp.dot(w3_ref[...], _tap_stack(h),
                        preferred_element_type=jnp.float32) + b3_ref[...])


def _pack_weight(w, cin_pad=None):
    """PyTorch Conv1d weight (Cout, Cin, K=3) -> (Cout, K*Cin), matching _tap_stack order."""
    cout, cin, _ = w.shape
    if cin_pad is not None and cin_pad > cin:
        w = jnp.pad(w, ((0, 0), (0, cin_pad - cin), (0, 0)))
    return jnp.transpose(w, (0, 2, 1)).reshape(cout, -1)


@jax.jit
def deep_inverse_1d(x_ncl, params):
    """x_ncl: (N, C_in, L) float32, native PyTorch layout. Returns (N, C_out, L) float32."""
    w1, b1, gamma, beta, w2, b2, w3, b3 = params   # PyTorch layouts
    del b1  # conv1 bias cancels exactly inside training-mode BatchNorm.
    N, c_in, L = x_ncl.shape
    c_out = w3.shape[0]

    # Pad input channels to a sublane multiple so tap stacking / conv1 stay 8-aligned.
    c_pad = max(_SUBLANE, -(-c_in // _SUBLANE) * _SUBLANE)
    x_p = jnp.pad(x_ncl, ((0, 0), (0, c_pad - c_in), (0, 0)))

    w1p = _pack_weight(w1, c_pad)          # (64, 3*c_pad)
    w2p = _pack_weight(w2)                 # (32, 192)
    w3p = _pack_weight(w3)                 # (c_out, 96)

    x_spec = pl.BlockSpec((1, c_pad, L), lambda n: (n, 0, 0))
    const = lambda shape: pl.BlockSpec(shape, lambda n: (0, 0))   # resident across grid
    cparams = pltpu.CompilerParams(dimension_semantics=("parallel",))

    # ---- Pass 1: per-sample conv1 channel sums (BN batch statistics), fully parallel.
    sums, ssqs = pl.pallas_call(
        _stats_kernel,
        grid=(N,),
        in_specs=[x_spec, const((64, 3 * c_pad))],
        out_specs=[pl.BlockSpec((1, 64, 1), lambda n: (n, 0, 0)),
                   pl.BlockSpec((1, 64, 1), lambda n: (n, 0, 0))],
        out_shape=[jax.ShapeDtypeStruct((N, 64, 1), jnp.float32),
                   jax.ShapeDtypeStruct((N, 64, 1), jnp.float32)],
        compiler_params=cparams,
    )(x_p, w1p)

    # Fold training-mode BN (biased variance, eps=1e-5) into per-channel scale/shift.
    count = jnp.float32(N * L)
    mean = jnp.sum(sums[:, :, 0], axis=0) / count
    var = jnp.sum(ssqs[:, :, 0], axis=0) / count - mean * mean
    inv = lax.rsqrt(var + EPS)
    scale = (gamma * inv)[:, None]                         # (64, 1)
    shift = (beta - mean * gamma * inv)[:, None]           # (64, 1)

    # ---- Pass 2: fused conv1 -> BN -> ReLU -> conv2 -> ReLU -> conv3, fully parallel.
    out = pl.pallas_call(
        _fused_kernel,
        grid=(N,),
        in_specs=[x_spec,
                  const((64, 3 * c_pad)),
                  const((64, 1)), const((64, 1)),
                  const((32, 3 * 64)), const((32, 1)),
                  const((c_out, 3 * 32)), const((c_out, 1))],
        out_specs=pl.BlockSpec((1, c_out, L), lambda n: (n, 0, 0)),
        out_shape=jax.ShapeDtypeStruct((N, c_out, L), jnp.float32),
        compiler_params=cparams,
    )(x_p, w1p, scale, shift, w2p, b2[:, None], w3p, b3[:, None])
    return out


# ----------------------------------------------------------------------------
# Deterministic parameter construction + pure-JAX reference for verification
# ----------------------------------------------------------------------------
def init_params(key, c_in, c_out):
    ks = jax.random.split(key, 6)
    # PyTorch Conv1d weight layout: (C_out, C_in, K)
    w1 = 0.1 * jax.random.normal(ks[0], (64, c_in, 3), jnp.float32)
    b1 = 0.05 * jax.random.normal(ks[1], (64,), jnp.float32)
    w2 = 0.1 * jax.random.normal(ks[2], (32, 64, 3), jnp.float32)
    b2 = 0.05 * jax.random.normal(ks[3], (32,), jnp.float32)
    w3 = 0.1 * jax.random.normal(ks[4], (c_out, 32, 3), jnp.float32)
    b3 = 0.05 * jax.random.normal(ks[5], (c_out,), jnp.float32)
    gamma = jnp.ones((64,), jnp.float32)
    beta = jnp.zeros((64,), jnp.float32)
    return (w1, b1, gamma, beta, w2, b2, w3, b3)


def reference_forward(x_ncl, params):
    w1, b1, gamma, beta, w2, b2, w3, b3 = params

    def conv1d(x, w, b):
        y = lax.conv_general_dilated(
            x, w, window_strides=(1,), padding=[(1, 1)],
            dimension_numbers=('NCH', 'OIH', 'NCH'))
        return y + b[None, :, None]

    h = conv1d(x_ncl, w1, b1)
    mu = jnp.mean(h, axis=(0, 2), keepdims=True)
    var = jnp.mean((h - mu) ** 2, axis=(0, 2), keepdims=True)
    h = (h - mu) / jnp.sqrt(var + EPS)
    h = h * gamma[None, :, None] + beta[None, :, None]
    h = jnp.maximum(h, 0.0)
    h = jnp.maximum(conv1d(h, w2, b2), 0.0)
    return conv1d(h, w3, b3)


if __name__ == "__main__":
    N, C_IN, C_OUT, L = 2, 4, 4, 16

    key = jax.random.PRNGKey(0)
    k_x, k_p = jax.random.split(key)
    x = jax.random.normal(k_x, (N, C_IN, L), jnp.float32)
    params = init_params(k_p, C_IN, C_OUT)

    out = jax.block_until_ready(deep_inverse_1d(x, params))
    ref = reference_forward(x, params)

    assert out.shape == (N, C_OUT, L), out.shape
    assert jnp.allclose(out, ref, rtol=1e-4, atol=1e-4), (
        float(jnp.max(jnp.abs(out - ref))))

    print("KERNEL_OK")
</pallas_src>

<mosaic_0001>
module attributes {stable_mosaic.version = 11 : i64} {
  func.func @_stats_kernel(%arg0: i32, %arg1: memref<1x8x16xf32, #tpu.memory_space<vmem>>, %arg2: memref<64x24xf32, #tpu.memory_space<vmem>>, %arg3: memref<1x64x1xf32, #tpu.memory_space<vmem>>, %arg4: memref<1x64x1xf32, #tpu.memory_space<vmem>>) attributes {dimension_semantics = [#tpu.dimension_semantics<parallel>], iteration_bounds = array<i64: 2>, scalar_prefetch = 0 : i64, scratch_operands = 0 : i64, tpu.core_type = #tpu.core_type<tc>, window_params = [{transform_indices = @transform_0, window_bounds = array<i64: 1, 8, 16>}, {pipeline_mode = #tpu.pipeline_mode<synchronous>, transform_indices = @transform_1, window_bounds = array<i64: 64, 24>}, {transform_indices = @transform_2, window_bounds = array<i64: 1, 64, 1>}, {transform_indices = @transform_3, window_bounds = array<i64: 1, 64, 1>}]} {
    %c0 = arith.constant 0 : index
    %c0_0 = arith.constant 0 : index
    %c0_1 = arith.constant 0 : index
    %0 = vector.load %arg1[%c0, %c0_0, %c0_1] : memref<1x8x16xf32, #tpu.memory_space<vmem>>, vector<1x8x16xf32>
    %1 = vector.shape_cast %0 : vector<1x8x16xf32> to vector<8x16xf32>
    %c0_2 = arith.constant 0 : index
    %c0_3 = arith.constant 0 : index
    %2 = vector.load %arg2[%c0_2, %c0_3] : memref<64x24xf32, #tpu.memory_space<vmem>>, vector<64x24xf32>
    %cst = arith.constant 0.000000e+00 : f32
    %3 = vector.broadcast %cst : f32 to vector<8x1xf32>
    %4 = tpu.concatenate %3, %1, %3 in 1 : vector<8x1xf32>, vector<8x16xf32>, vector<8x1xf32> -> vector<8x18xf32>
    %5 = vector.extract_strided_slice %4 {offsets = [0, 0], sizes = [8, 16], strides = [1, 1]} : vector<8x18xf32> to vector<8x16xf32>
    %6 = vector.extract_strided_slice %4 {offsets = [0, 1], sizes = [8, 16], strides = [1, 1]} : vector<8x18xf32> to vector<8x16xf32>
    %7 = vector.extract_strided_slice %4 {offsets = [0, 2], sizes = [8, 16], strides = [1, 1]} : vector<8x18xf32> to vector<8x16xf32>
    %8 = tpu.concatenate %5, %6, %7 in 0 : vector<8x16xf32>, vector<8x16xf32>, vector<8x16xf32> -> vector<24x16xf32>
    %cst_4 = arith.constant dense<0.000000e+00> : vector<64x16xf32>
    %9 = tpu.matmul %2, %8, %cst_4 {dimension_numbers = #tpu.dot_dimension_numbers<[1], [0], [0], [1], [0, 0, 1, 1], [], []>} : vector<64x24xf32>, vector<24x16xf32>, vector<64x16xf32> -> vector<64x16xf32>
    %cst_5 = arith.constant dense<0.000000e+00> : vector<64xf32>
    %10 = vector.multi_reduction <add>, %9, %cst_5 [1] : vector<64x16xf32> to vector<64xf32>
    %11 = vector.shape_cast %10 : vector<64xf32> to vector<64x1xf32>
    %c0_6 = arith.constant 0 : index
    %c0_7 = arith.constant 0 : index
    %c0_8 = arith.constant 0 : index
    %12 = vector.load %arg3[%c0_6, %c0_7, %c0_8] : memref<1x64x1xf32, #tpu.memory_space<vmem>>, vector<1x64x1xf32>
    %13 = vector.shape_cast %12 : vector<1x64x1xf32> to vector<64x1xf32>
    %14 = vector.shape_cast %11 : vector<64x1xf32> to vector<1x64x1xf32>
    tpu.vector_store %arg3[%c0_6, %c0_7, %c0_8], %14 {strides = array<i32>} : memref<1x64x1xf32, #tpu.memory_space<vmem>>, vector<1x64x1xf32>,
    %15 = arith.mulf %9, %9 : vector<64x16xf32>
    %cst_9 = arith.constant dense<0.000000e+00> : vector<64xf32>
    %16 = vector.multi_reduction <add>, %15, %cst_9 [1] : vector<64x16xf32> to vector<64xf32>
    %17 = vector.shape_cast %16 : vector<64xf32> to vector<64x1xf32>
    %c0_10 = arith.constant 0 : index
    %c0_11 = arith.constant 0 : index
    %c0_12 = arith.constant 0 : index
    %18 = vector.load %arg4[%c0_10, %c0_11, %c0_12] : memref<1x64x1xf32, #tpu.memory_space<vmem>>, vector<1x64x1xf32>
    %19 = vector.shape_cast %18 : vector<1x64x1xf32> to vector<64x1xf32>
    %20 = vector.shape_cast %17 : vector<64x1xf32> to vector<1x64x1xf32>
    tpu.vector_store %arg4[%c0_10, %c0_11, %c0_12], %20 {strides = array<i32>} : memref<1x64x1xf32, #tpu.memory_space<vmem>>, vector<1x64x1xf32>,
    return
  }
  func.func @transform_0(%arg0: i32) -> (i32, i32, i32) {
    %c0_i32 = arith.constant 0 : i32
    %c0_i32_0 = arith.constant 0 : i32
    %c0_i32_1 = arith.constant 0 : i32
    return %arg0, %c0_i32, %c0_i32_0 : i32, i32, i32
  }
  func.func @transform_1(%arg0: i32) -> (i32, i32) {
    %c0_i32 = arith.constant 0 : i32
    %c0_i32_0 = arith.constant 0 : i32
    %c0_i32_1 = arith.constant 0 : i32
    return %c0_i32, %c0_i32_0 : i32, i32
  }
  func.func @transform_2(%arg0: i32) -> (i32, i32, i32) {
    %c0_i32 = arith.constant 0 : i32
    %c0_i32_0 = arith.constant 0 : i32
    %c0_i32_1 = arith.constant 0 : i32
    return %arg0, %c0_i32, %c0_i32_0 : i32, i32, i32
  }
  func.func @transform_3(%arg0: i32) -> (i32, i32, i32) {
    %c0_i32 = arith.constant 0 : i32
    %c0_i32_0 = arith.constant 0 : i32
    %c0_i32_1 = arith.constant 0 : i32
    return %arg0, %c0_i32, %c0_i32_0 : i32, i32, i32
  }
}

module attributes {stable_mosaic.version = 11 : i64} {
  func.func @_fused_kernel(%arg0: i32, %arg1: memref<1x8x16xf32, #tpu.memory_space<vmem>>, %arg2: memref<64x24xf32, #tpu.memory_space<vmem>>, %arg3: memref<64x1xf32, #tpu.memory_space<vmem>>, %arg4: memref<64x1xf32, #tpu.memory_space<vmem>>, %arg5: memref<32x192xf32, #tpu.memory_space<vmem>>, %arg6: memref<32x1xf32, #tpu.memory_space<vmem>>, %arg7: memref<4x96xf32, #tpu.memory_space<vmem>>, %arg8: memref<4x1xf32, #tpu.memory_space<vmem>>, %arg9: memref<1x4x16xf32, #tpu.memory_space<vmem>>) attributes {dimension_semantics = [#tpu.dimension_semantics<parallel>], iteration_bounds = array<i64: 2>, scalar_prefetch = 0 : i64, scratch_operands = 0 : i64, tpu.core_type = #tpu.core_type<tc>, window_params = [{transform_indices = @transform_0, window_bounds = array<i64: 1, 8, 16>}, {pipeline_mode = #tpu.pipeline_mode<synchronous>, transform_indices = @transform_1, window_bounds = array<i64: 64, 24>}, {pipeline_mode = #tpu.pipeline_mode<synchronous>, transform_indices = @transform_2, window_bounds = array<i64: 64, 1>}, {pipeline_mode = #tpu.pipeline_mode<synchronous>, transform_indices = @transform_3, window_bounds = array<i64: 64, 1>}, {pipeline_mode = #tpu.pipeline_mode<synchronous>, transform_indices = @transform_4, window_bounds = array<i64: 32, 192>}, {pipeline_mode = #tpu.pipeline_mode<synchronous>, transform_indices = @transform_5, window_bounds = array<i64: 32, 1>}, {pipeline_mode = #tpu.pipeline_mode<synchronous>, transform_indices = @transform_6, window_bounds = array<i64: 4, 96>}, {pipeline_mode = #tpu.pipeline_mode<synchronous>, transform_indices = @transform_7, window_bounds = array<i64: 4, 1>}, {transform_indices = @transform_8, window_bounds = array<i64: 1, 4, 16>}]} {
    %c0 = arith.constant 0 : index
    %c0_0 = arith.constant 0 : index
    %c0_1 = arith.constant 0 : index
    %0 = vector.load %arg1[%c0, %c0_0, %c0_1] : memref<1x8x16xf32, #tpu.memory_space<vmem>>, vector<1x8x16xf32>
    %1 = vector.shape_cast %0 : vector<1x8x16xf32> to vector<8x16xf32>
    %c0_2 = arith.constant 0 : index
    %c0_3 = arith.constant 0 : index
    %2 = vector.load %arg2[%c0_2, %c0_3] : memref<64x24xf32, #tpu.memory_space<vmem>>, vector<64x24xf32>
    %cst = arith.constant 0.000000e+00 : f32
    %3 = vector.broadcast %cst : f32 to vector<8x1xf32>
    %4 = tpu.concatenate %3, %1, %3 in 1 : vector<8x1xf32>, vector<8x16xf32>, vector<8x1xf32> -> vector<8x18xf32>
    %5 = vector.extract_strided_slice %4 {offsets = [0, 0], sizes = [8, 16], strides = [1, 1]} : vector<8x18xf32> to vector<8x16xf32>
    %6 = vector.extract_strided_slice %4 {offsets = [0, 1], sizes = [8, 16], strides = [1, 1]} : vector<8x18xf32> to vector<8x16xf32>
    %7 = vector.extract_strided_slice %4 {offsets = [0, 2], sizes = [8, 16], strides = [1, 1]} : vector<8x18xf32> to vector<8x16xf32>
    %8 = tpu.concatenate %5, %6, %7 in 0 : vector<8x16xf32>, vector<8x16xf32>, vector<8x16xf32> -> vector<24x16xf32>
    %cst_4 = arith.constant dense<0.000000e+00> : vector<64x16xf32>
    %9 = tpu.matmul %2, %8, %cst_4 {dimension_numbers = #tpu.dot_dimension_numbers<[1], [0], [0], [1], [0, 0, 1, 1], [], []>} : vector<64x24xf32>, vector<24x16xf32>, vector<64x16xf32> -> vector<64x16xf32>
    %c0_5 = arith.constant 0 : index
    %c0_6 = arith.constant 0 : index
    %10 = vector.load %arg3[%c0_5, %c0_6] : memref<64x1xf32, #tpu.memory_space<vmem>>, vector<64x1xf32>
    %11 = vector.broadcast %10 : vector<64x1xf32> to vector<64x16xf32>
    %12 = arith.mulf %9, %11 : vector<64x16xf32>
    %c0_7 = arith.constant 0 : index
    %c0_8 = arith.constant 0 : index
    %13 = vector.load %arg4[%c0_7, %c0_8] : memref<64x1xf32, #tpu.memory_space<vmem>>, vector<64x1xf32>
    %14 = vector.broadcast %13 : vector<64x1xf32> to vector<64x16xf32>
    %15 = arith.addf %12, %14 : vector<64x16xf32>
    %cst_9 = arith.constant 0.000000e+00 : f32
    %16 = vector.broadcast %cst_9 : f32 to vector<64x16xf32>
    %17 = arith.maximumf %15, %16 : vector<64x16xf32>
    %c0_10 = arith.constant 0 : index
    %c0_11 = arith.constant 0 : index
    %18 = vector.load %arg5[%c0_10, %c0_11] : memref<32x192xf32, #tpu.memory_space<vmem>>, vector<32x192xf32>
    %cst_12 = arith.constant 0.000000e+00 : f32
    %19 = vector.broadcast %cst_12 : f32 to vector<64x1xf32>
    %20 = tpu.concatenate %19, %17, %19 in 1 : vector<64x1xf32>, vector<64x16xf32>, vector<64x1xf32> -> vector<64x18xf32>
    %21 = vector.extract_strided_slice %20 {offsets = [0, 0], sizes = [64, 16], strides = [1, 1]} : vector<64x18xf32> to vector<64x16xf32>
    %22 = vector.extract_strided_slice %20 {offsets = [0, 1], sizes = [64, 16], strides = [1, 1]} : vector<64x18xf32> to vector<64x16xf32>
    %23 = vector.extract_strided_slice %20 {offsets = [0, 2], sizes = [64, 16], strides = [1, 1]} : vector<64x18xf32> to vector<64x16xf32>
    %24 = tpu.concatenate %21, %22, %23 in 0 : vector<64x16xf32>, vector<64x16xf32>, vector<64x16xf32> -> vector<192x16xf32>
    %cst_13 = arith.constant dense<0.000000e+00> : vector<32x16xf32>
    %25 = tpu.matmul %18, %24, %cst_13 {dimension_numbers = #tpu.dot_dimension_numbers<[1], [0], [0], [1], [0, 0, 1, 1], [], []>} : vector<32x192xf32>, vector<192x16xf32>, vector<32x16xf32> -> vector<32x16xf32>
    %c0_14 = arith.constant 0 : index
    %c0_15 = arith.constant 0 : index
    %26 = vector.load %arg6[%c0_14, %c0_15] : memref<32x1xf32, #tpu.memory_space<vmem>>, vector<32x1xf32>
    %27 = vector.broadcast %26 : vector<32x1xf32> to vector<32x16xf32>
    %28 = arith.addf %25, %27 : vector<32x16xf32>
    %cst_16 = arith.constant 0.000000e+00 : f32
    %29 = vector.broadcast %cst_16 : f32 to vector<32x16xf32>
    %30 = arith.maximumf %28, %29 : vector<32x16xf32>
    %c0_17 = arith.constant 0 : index
    %c0_18 = arith.constant 0 : index
    %31 = vector.load %arg7[%c0_17, %c0_18] : memref<4x96xf32, #tpu.memory_space<vmem>>, vector<4x96xf32>
    %cst_19 = arith.constant 0.000000e+00 : f32
    %32 = vector.broadcast %cst_19 : f32 to vector<32x1xf32>
    %33 = tpu.concatenate %32, %30, %32 in 1 : vector<32x1xf32>, vector<32x16xf32>, vector<32x1xf32> -> vector<32x18xf32>
    %34 = vector.extract_strided_slice %33 {offsets = [0, 0], sizes = [32, 16], strides = [1, 1]} : vector<32x18xf32> to vector<32x16xf32>
    %35 = vector.extract_strided_slice %33 {offsets = [0, 1], sizes = [32, 16], strides = [1, 1]} : vector<32x18xf32> to vector<32x16xf32>
    %36 = vector.extract_strided_slice %33 {offsets = [0, 2], sizes = [32, 16], strides = [1, 1]} : vector<32x18xf32> to vector<32x16xf32>
    %37 = tpu.concatenate %34, %35, %36 in 0 : vector<32x16xf32>, vector<32x16xf32>, vector<32x16xf32> -> vector<96x16xf32>
    %cst_20 = arith.constant dense<0.000000e+00> : vector<4x16xf32>
    %38 = tpu.matmul %31, %37, %cst_20 {dimension_numbers = #tpu.dot_dimension_numbers<[1], [0], [0], [1], [0, 0, 1, 1], [], []>} : vector<4x96xf32>, vector<96x16xf32>, vector<4x16xf32> -> vector<4x16xf32>
    %c0_21 = arith.constant 0 : index
    %c0_22 = arith.constant 0 : index
    %39 = vector.load %arg8[%c0_21, %c0_22] : memref<4x1xf32, #tpu.memory_space<vmem>>, vector<4x1xf32>
    %40 = vector.broadcast %39 : vector<4x1xf32> to vector<4x16xf32>
    %41 = arith.addf %38, %40 : vector<4x16xf32>
    %c0_23 = arith.constant 0 : index
    %c0_24 = arith.constant 0 : index
    %c0_25 = arith.constant 0 : index
    %42 = vector.load %arg9[%c0_23, %c0_24, %c0_25] : memref<1x4x16xf32, #tpu.memory_space<vmem>>, vector<1x4x16xf32>
    %43 = vector.shape_cast %42 : vector<1x4x16xf32> to vector<4x16xf32>
    %44 = vector.shape_cast %41 : vector<4x16xf32> to vector<1x4x16xf32>
    tpu.vector_store %arg9[%c0_23, %c0_24, %c0_25], %44 {strides = array<i32>} : memref<1x4x16xf32, #tpu.memory_space<vmem>>, vector<1x4x16xf32>,
    return
  }
  func.func @transform_0(%arg0: i32) -> (i32, i32, i32) {
    %c0_i32 = arith.constant 0 : i32
    %c0_i32_0 = arith.constant 0 : i32
    %c0_i32_1 = arith.constant 0 : i32
    return %arg0, %c0_i32, %c0_i32_0 : i32, i32, i32
  }
  func.func @transform_1(%arg0: i32) -> (i32, i32) {
    %c0_i32 = arith.constant 0 : i32
    %c0_i32_0 = arith.constant 0 : i32
    %c0_i32_1 = arith.constant 0 : i32
    return %c0_i32, %c0_i32_0 : i32, i32
  }
  func.func @transform_2(%arg0: i32) -> (i32, i32) {
    %c0_i32 = arith.constant 0 : i32
    %c0_i32_0 = arith.constant 0 : i32
    %c0_i32_1 = arith.constant 0 : i32
    return %c0_i32, %c0_i32_0 : i32, i32
  }
  func.func @transform_3(%arg0: i32) -> (i32, i32) {
    %c0_i32 = arith.constant 0 : i32
    %c0_i32_0 = arith.constant 0 : i32
    %c0_i32_1 = arith.constant 0 : i32
    return %c0_i32, %c0_i32_0 : i32, i32
  }
  func.func @transform_4(%arg0: i32) -> (i32, i32) {
    %c0_i32 = arith.constant 0 : i32
    %c0_i32_0 = arith.constant 0 : i32
    %c0_i32_1 = arith.constant 0 : i32
    return %c0_i32, %c0_i32_0 : i32, i32
  }
  func.func @transform_5(%arg0: i32) -> (i32, i32) {
    %c0_i32 = arith.constant 0 : i32
    %c0_i32_0 = arith.constant 0 : i32
    %c0_i32_1 = arith.constant 0 : i32
    return %c0_i32, %c0_i32_0 : i32, i32
  }
  func.func @transform_6(%arg0: i32) -> (i32, i32) {
    %c0_i32 = arith.constant 0 : i32
    %c0_i32_0 = arith.constant 0 : i32
    %c0_i32_1 = arith.constant 0 : i32
    return %c0_i32, %c0_i32_0 : i32, i32
  }
  func.func @transform_7(%arg0: i32) -> (i32, i32) {
    %c0_i32 = arith.constant 0 : i32
    %c0_i32_0 = arith.constant 0 : i32
    %c0_i32_1 = arith.constant 0 : i32
    return %c0_i32, %c0_i32_0 : i32, i32
  }
  func.func @transform_8(%arg0: i32) -> (i32, i32, i32) {
    %c0_i32 = arith.constant 0 : i32
    %c0_i32_0 = arith.constant 0 : i32
    %c0_i32_1 = arith.constant 0 : i32
    return %arg0, %c0_i32, %c0_i32_0 : i32, i32, i32
  }
}

</mosaic_0001>

<llo_original>
// kernel: deep_inverse_1d.2
$region0: #{deep_inverse_1d.2}
  #allocation0 [shape = 'u32[]', space=smem, size = 0x4, offset = 0x4, fixed_abs, tag = 'smem constant byte address 0x4 - core index']
  #allocation1 [shape = 'u32[144,128]{1,0:T(1,128)}', space=vmem, size = 0x12000, scoped, tag = 'internal scratch']
  %s0 = inlined_call_operand.vmem [shape: f32[2,8,16], index: 0, kind: input, shape index: {}]
  %s1 = inlined_call_operand.vmem [shape: f32[64,24], index: 1, kind: input, shape index: {}]
  %s2 = inlined_call_operand.vmem [shape: f32[2,64,1], index: 2, kind: output, shape index: {0}]
  %s3 = inlined_call_operand.vmem [shape: f32[2,64,1], index: 3, kind: output, shape index: {1}]
  %4 = xla_tuple %s2, %s3
  %s5 = sld [smem:[#allocation0]]
  $region49: #{deep_inverse_1d.2} parent=0
    _
  %s7 = ssub.s32 1, %s5
  %s8 = scalar_select 0, %s7, %s5
  loop: start=0, step=1, limit=4
  $region2: #{deep_inverse_1d.2} parent=0 // loop_pre_header
    _
  $region3: #{deep_inverse_1d.2} parent=0 // loop_header
    %s10 = sphi 0, %s14
    %p11 = scmp.ge.s32.totalorder %s10, 4
    %s20 = sphi 0, %s22
    %s23 = sphi 0, %s20
    %s24 = sphi 0, %s23
    %s40 = sphi 0, %s24
    %s44 = sphi 0, %s44
    %s46 = sphi 0, %s44
    %s47 = sphi 0, %s46
    %s61 = sphi 0, %s47
    %s67 = sphi 0, %s69
    %s70 = sphi 0, %s67
    %s71 = sphi 0, %s70
    %s87 = sphi 0, %s71
    %s93 = sphi 0, %s95
    %s96 = sphi 0, %s93
    %s97 = sphi 0, %s96
    %s113 = sphi 0, %s97
  $region4: #{deep_inverse_1d.2} parent=0 // loop_header_branch
    %13 = sbr.rel (%p11) target = $region8
  $region5: #{deep_inverse_1d.2} parent=0 // loop_body
    %s15 = ssub.s32 %s10, 1
    %s16 = ssub.s32 %s10, 2
    %s17 = sadd.s32 %s10, 1
    %s18 = ssub.s32 %s10, %s17
    %p19 = scmp.eq.s32.totalorder %s18, 0
    %s21 = sadd.s32 %s20, 1
    %s22 = scalar_select %p19, %s20, %s21
    %p25 = pneg %p19
    %p26 = scmp.eq.s32.totalorder %s10, 1
    %p27 = por %p25, %p26
    %p28 = scmp.ne.s32.totalorder %s20, %s23
    %p29 = scmp.eq.s32.totalorder %s10, 0
    %p30 = por %p28, %p29
    %p31 = scmp.ne.s32.totalorder %s20, %s23
    %p32 = scmp.eq.s32.totalorder %s15, 1
    %p33 = por %p31, %p32
    %p34 = scmp.ne.s32.totalorder %s23, %s24
    %p35 = scmp.eq.s32.totalorder %s15, 0
    %p36 = por %p34, %p35
    %p37 = scmp.ne.s32.totalorder %s23, %s24
    %p38 = scmp.eq.s32.totalorder %s16, 1
    %p39 = por %p37, %p38
    %p41 = scmp.ne.s32.totalorder %s24, %s40
    %p42 = scmp.eq.s32.totalorder %s16, 0
    %p43 = por %p41, %p42
    %s45 = sadd.s32 %s44, 1
    %p48 = scmp.eq.s32.totalorder %s10, 1
    %p49 = scmp.ne.s32.totalorder %s44, %s46
    %p50 = scmp.eq.s32.totalorder %s10, 0
    %p51 = por %p49, %p50
    %p52 = scmp.ne.s32.totalorder %s44, %s46
    %p53 = scmp.eq.s32.totalorder %s15, 1
    %p54 = por %p52, %p53
    %p55 = scmp.ne.s32.totalorder %s46, %s47
    %p56 = scmp.eq.s32.totalorder %s15, 0
    %p57 = por %p55, %p56
    %p58 = scmp.ne.s32.totalorder %s46, %s47
    %p59 = scmp.eq.s32.totalorder %s16, 1
    %p60 = por %p58, %p59
    %p62 = scmp.ne.s32.totalorder %s47, %s61
    %p63 = scmp.eq.s32.totalorder %s16, 0
    %p64 = por %p62, %p63
    %s65 = ssub.s32 %s10, %s17
    %p66 = scmp.eq.s32.totalorder %s65, 0
    %s68 = sadd.s32 %s67, 1
    %s69 = scalar_select %p66, %s67, %s68
    %p72 = pneg %p66
    %p73 = scmp.eq.s32.totalorder %s10, 1
    %p74 = por %p72, %p73
    %p75 = scmp.ne.s32.totalorder %s67, %s70
    %p76 = scmp.eq.s32.totalorder %s10, 0
    %p77 = por %p75, %p76
    %p78 = scmp.ne.s32.totalorder %s67, %s70
    %p79 = scmp.eq.s32.totalorder %s15, 1
    %p80 = por %p78, %p79
    %p81 = scmp.ne.s32.totalorder %s70, %s71
    %p82 = scmp.eq.s32.totalorder %s15, 0
    %p83 = por %p81, %p82
    %p84 = scmp.ne.s32.totalorder %s70, %s71
    %p85 = scmp.eq.s32.totalorder %s16, 1
    %p86 = por %p84, %p85
    %p88 = scmp.ne.s32.totalorder %s71, %s87
    %p89 = scmp.eq.s32.totalorder %s16, 0
    %p90 = por %p88, %p89
    %s91 = ssub.s32 %s10, %s17
    %p92 = scmp.eq.s32.totalorder %s91, 0
    %s94 = sadd.s32 %s93, 1
    %s95 = scalar_select %p92, %s93, %s94
    %p98 = pneg %p92
    %p99 = scmp.eq.s32.totalorder %s10, 1
    %p100 = por %p98, %p99
    %p101 = scmp.ne.s32.totalorder %s93, %s96
    %p102 = scmp.eq.s32.totalorder %s10, 0
    %p103 = por %p101, %p102
    %p104 = scmp.ne.s32.totalorder %s93, %s96
    %p105 = scmp.eq.s32.totalorder %s15, 1
    %p106 = por %p104, %p105
    %p107 = scmp.ne.s32.totalorder %s96, %s97
    %p108 = scmp.eq.s32.totalorder %s15, 0
    %p109 = por %p107, %p108
    %p110 = scmp.ne.s32.totalorder %s96, %s97
    %p111 = scmp.eq.s32.totalorder %s16, 1
    %p112 = por %p110, %p111
    %p114 = scmp.ne.s32.totalorder %s97, %s113
    %p115 = scmp.eq.s32.totalorder %s16, 0
    %p116 = por %p114, %p115
    %p117 = scmp.le.s32.totalorder 1, %s10
    %p118 = scmp.lt.s32.totalorder %s10, 3
    %p119 = pnand %p117, %p118
    %p120 = pneg %p119
    // Predicated region
    $region9: #{deep_inverse_1d.2} parent=5 // pred_check
      _
    $region10: #{deep_inverse_1d.2} parent=5 // pred_check_branch
      %122 = sbr.rel (%p119) target = $region12
    $region11: #{deep_inverse_1d.2} parent=5 // pred_region
      %s123 = ssub.s32 %s10, 1
      // Predicated region
      $region13: #{deep_inverse_1d.2} parent=11 // pred_check
        %p124 = pneg %p57
      $region14: #{deep_inverse_1d.2} parent=11 // pred_check_branch
        %126 = sbr.rel (%p124) target = $region16
      $region15: #{deep_inverse_1d.2} parent=11 // pred_region
        _
      $region16: #{deep_inverse_1d.2} parent=11 // pred_fallthru
        _
    $region12: #{deep_inverse_1d.2} parent=5 // pred_fallthru
      _
    %p127 = scmp.lt.s32.totalorder %s10, 2
    // Predicated region
    $region17: #{deep_inverse_1d.2} parent=5 // pred_check
      %p128 = pneg %p127
    $region18: #{deep_inverse_1d.2} parent=5 // pred_check_branch
      %130 = sbr.rel (%p128) target = $region20
    $region19: #{deep_inverse_1d.2} parent=5 // pred_region
      // Predicated region
      $region21: #{deep_inverse_1d.2} parent=19 // pred_check
        %p131 = pneg %p30
      $region22: #{deep_inverse_1d.2} parent=19 // pred_check_branch
        %133 = sbr.rel (%p131) target = $region24
      $region23: #{deep_inverse_1d.2} parent=19 // pred_region
        %p134 = scmp.lt.s32.totalorder %s10, 1
        %s135 = scalar_select %p134, %s10, 1
        %s136 = smul.addr %s135, 8
        %s137 = scalar_lea.vmem %s0, %s136
      $region24: #{deep_inverse_1d.2} parent=19 // pred_fallthru
        _
    $region20: #{deep_inverse_1d.2} parent=5 // pred_fallthru
      _
    %p138 = scmp.le.s32.totalorder 1, %s10
    %p139 = scmp.lt.s32.totalorder %s10, 3
    %p140 = pnand %p138, %p139
    %p141 = pneg %p140
    // Predicated region
    $region25: #{deep_inverse_1d.2} parent=5 // pred_check
      _
    $region26: #{deep_inverse_1d.2} parent=5 // pred_check_branch
      %143 = sbr.rel (%p140) target = $region28
    $region27: #{deep_inverse_1d.2} parent=5 // pred_region
      %s144 = ssub.s32 %s10, 1
      %p145 = scmp.lt.s32.totalorder %s15, 1
      %s146 = scalar_select %p145, %s15, 1
      %s147 = smul.addr %s146, 8
      %s148 = scalar_lea.vmem %s0, %s147
      %p149 = pneg %p36
      %p150 = pneg %p33
      %p151 = pneg %p57
      %p152 = pneg %p54
      %p153 = pneg %p83
      %p154 = pneg %p80
      %p155 = scmp.lt.s32.totalorder %s15, 1
      %s156 = scalar_select %p155, %s15, 1
      %s157 = smul.addr %s156, 8
      %s158 = smul.addr %s157, 8
      %s159 = scalar_lea.vmem %s2, %s158
      %p160 = pneg %p109
      %p161 = pneg %p106
      %p162 = scmp.lt.s32.totalorder %s15, 1
      %s163 = scalar_select %p162, %s15, 1
      %s164 = smul.addr %s163, 8
      %s165 = smul.addr %s164, 8
      %s166 = scalar_lea.vmem %s3, %s165
      %p167 = scmp.lt.s32.totalorder %s15, 1
      %s168 = scalar_select %p167, %s15, 1
      %s169 = smul.addr %s168, 8
      %s170 = scalar_lea.vmem %s0, %s169
      %p171 = scmp.lt.s32.totalorder %s15, 1
      %s172 = scalar_select %p171, %s15, 1
      %s173 = smul.addr %s172, 8
      %s174 = smul.addr %s173, 8
      %s175 = scalar_lea.vmem %s2, %s174
      %p176 = scmp.lt.s32.totalorder %s15, 1
      %s177 = scalar_select %p176, %s15, 1
      %s178 = smul.addr %s177, 8
      %s179 = smul.addr %s178, 8
      %s180 = scalar_lea.vmem %s3, %s179
      %v181 = vld [vmem:[%s170] sm:$0xff]
      %v182 = vld [vmem:[%s1] sm:$0xff]
      %v183 = vld [vmem:[%s1 + $0x8] sm:$0xff]
      %v184 = vld [vmem:[%s1 + $0x10] sm:$0xff]
      %v185 = vld [vmem:[%s1 + $0x18] sm:$0xff]
      %v186 = vld [vmem:[%s1 + $0x20] sm:$0xff]
      %v187 = vld [vmem:[%s1 + $0x28] sm:$0xff]
      %v188 = vld [vmem:[%s1 + $0x30] sm:$0xff]
      %v189 = vld [vmem:[%s1 + $0x38] sm:$0xff]
      %191 = vrot.lane.b32.xlu0 %v181, 1
      %v192 = vpop.permute.xlu0 %191
      %vm194 = vcmask 7168
      %v195 = vsel %vm194, 0.0, %v192
      %vm196 = vcmask 138240
      %v197 = vsel %vm196, %v195, 0.0
      %199 = vrot.lane.b32.xlu0 %v197, 127
      %v200 = vpop.permute.xlu0 %199
      %202 = vrot.lane.b32.xlu0 %v197, 126
      %v203 = vpop.permute.xlu0 %202
      %vm205 = vcmask 195584
      %v207 = vsel %vm205, %v182, 0
      %v210 = vsel %vm205, %v183, 0
      %v213 = vsel %vm205, %v184, 0
      %v216 = vsel %vm205, %v185, 0
      %v219 = vsel %vm205, %v186, 0
      %v222 = vsel %vm205, %v187, 0
      %v225 = vsel %vm205, %v188, 0
      %v228 = vsel %vm205, %v189, 0
      %230 = vmatprep.subr.mxu0 0.0
      %231 = vmatpush1.msra.mxu0 0.0
      %232 = vmatprep.subr.mxu0 0.0
      %233 = vmatpush1.msra.mxu0 0.0
      %234 = vmatprep.subr.mxu0 0.0
      %235 = vmatpush1.msra.mxu0 0.0
      %236 = vmatprep.subr.mxu0 0.0
      %237 = vmatpush1.msra.mxu0 0.0
      %238 = vmatprep.subr.mxu0 0.0
      %239 = vmatpush1.msra.mxu0 0.0
      %240 = vmatprep.subr.mxu0 0.0
      %241 = vmatpush1.msra.mxu0 0.0
      %242 = vmatprep.subr.mxu0 0.0
      %243 = vmatpush1.msra.mxu0 0.0
      %244 = vmatprep.subr.mxu0 0.0
      %245 = vmatpush1.msra.mxu0 0.0
      %246 = vmatprep.subr.mxu0 0.0
      %247 = vmatpush1.msra.mxu0 0.0
      %248 = vmatprep.subr.mxu0 0.0
      %249 = vmatpush1.msra.mxu0 0.0
      %250 = vmatprep.subr.mxu0 0.0
      %251 = vmatpush1.msra.mxu0 0.0
      %252 = vmatprep.subr.mxu0 0.0
      %253 = vmatpush1.msra.mxu0 0.0
      %254 = vmatprep.subr.mxu0 0.0
      %255 = vmatpush1.msra.mxu0 0.0
      %256 = vmatprep.subr.mxu0 0.0
      %257 = vmatpush1.msra.mxu0 %v203
      %258 = vmatprep.subr.mxu0 0.0
      %259 = vmatpush1.msra.mxu0 %v200
      %260 = vmatprep.subr.mxu0 0.0
      %261 = vmatpush1.msra.mxu0 %v197
      %262 = vmatprep.subr.mxu0 0.0
      %263 = vmatpush2.msra.mxu0 0.0
      %264 = vmatprep.subr.mxu0 0.0
      %265 = vmatpush2.msra.mxu0 0.0
      %266 = vmatprep.subr.mxu0 0.0
      %267 = vmatpush2.msra.mxu0 0.0
      %268 = vmatprep.subr.mxu0 0.0
      %269 = vmatpush2.msra.mxu0 0.0
      %270 = vmatprep.subr.mxu0 0.0
      %271 = vmatpush2.msra.mxu0 0.0
      %272 = vmatprep.subr.mxu0 0.0
      %273 = vmatpush2.msra.mxu0 0.0
      %274 = vmatprep.subr.mxu0 0.0
      %275 = vmatpush2.msra.mxu0 0.0
      %276 = vmatprep.subr.mxu0 0.0
      %277 = vmatpush2.msra.mxu0 0.0
      %278 = vmatprep.subr.mxu0 0.0
      %279 = vmatpush2.msra.mxu0 0.0
      %280 = vmatprep.subr.mxu0 0.0
      %281 = vmatpush2.msra.mxu0 0.0
      %282 = vmatprep.subr.mxu0 0.0
      %283 = vmatpush2.msra.mxu0 0.0
      %284 = vmatprep.subr.mxu0 0.0
      %285 = vmatpush2.msra.mxu0 0.0
      %286 = vmatprep.subr.mxu0 0.0
      %287 = vmatpush2.msra.mxu0 0.0
      %288 = vmatprep.subr.mxu0 0.0
      %289 = vmatpush2.msra.mxu0 0.0
      %290 = vmatprep.subr.mxu0 0.0
      %291 = vmatpush2.msra.mxu0 0.0
      %292 = vmatprep.subr.mxu0 0.0
      %293 = vmatpush2.msra.mxu0 0.0
      %294 = vmatprep.mubr.f32.mxu0 0.0
      %295 = vmatmul.mubr.f32.gmra.mxu0 %v207
      %v296 = vpop.f32.mrf.mxu0
      %v297 = vadd.f32 0.0, %v296
      %v298 = vpop.f32.mrf.mxu0
      %299 = vmatprep.mubr.f32.mxu0 0.0
      %300 = vmatmul.mubr.f32.gmra.mxu0 %v210
      %v301 = vpop.f32.mrf.mxu0
      %v302 = vadd.f32 0.0, %v301
      %v303 = vpop.f32.mrf.mxu0
      %304 = vmatprep.mubr.f32.mxu0 0.0
      %305 = vmatmul.mubr.f32.gmra.mxu0 %v213
      %v306 = vpop.f32.mrf.mxu0
      %v307 = vadd.f32 0.0, %v306
      %v308 = vpop.f32.mrf.mxu0
      %309 = vmatprep.mubr.f32.mxu0 0.0
      %310 = vmatmul.mubr.f32.gmra.mxu0 %v216
      %v311 = vpop.f32.mrf.mxu0
      %v312 = vadd.f32 0.0, %v311
      %v313 = vpop.f32.mrf.mxu0
      %314 = vmatprep.mubr.f32.mxu0 0.0
      %315 = vmatmul.mubr.f32.gmra.mxu0 %v219
      %v316 = vpop.f32.mrf.mxu0
      %v317 = vadd.f32 0.0, %v316
      %v318 = vpop.f32.mrf.mxu0
      %319 = vmatprep.mubr.f32.mxu0 0.0
      %320 = vmatmul.mubr.f32.gmra.mxu0 %v222
      %v321 = vpop.f32.mrf.mxu0
      %v322 = vadd.f32 0.0, %v321
      %v323 = vpop.f32.mrf.mxu0
      %324 = vmatprep.mubr.f32.mxu0 0.0
      %325 = vmatmul.mubr.f32.gmra.mxu0 %v225
      %v326 = vpop.f32.mrf.mxu0
      %v327 = vadd.f32 0.0, %v326
      %v328 = vpop.f32.mrf.mxu0
      %329 = vmatprep.mubr.f32.mxu0 0.0
      %330 = vmatmul.mubr.f32.gmra.mxu0 %v228
      %v331 = vpop.f32.mrf.mxu0
      %v332 = vadd.f32 0.0, %v331
      %v333 = vpop.f32.mrf.mxu0
      %334 = vdwg.mxu0
      %vm335 = vcmask 130048
      %v336 = vsel %vm335, %v297, 0.0
      %337 = vadd.xlane.f32.xlu0 %v336
      %v338 = vpop.xlane.xlu0 %337
      %v339 = vsel %vm335, %v302, 0.0
      %340 = vadd.xlane.f32.xlu0 %v339
      %v341 = vpop.xlane.xlu0 %340
      %v342 = vsel %vm335, %v307, 0.0
      %343 = vadd.xlane.f32.xlu0 %v342
      %v344 = vpop.xlane.xlu0 %343
      %v345 = vsel %vm335, %v312, 0.0
      %346 = vadd.xlane.f32.xlu0 %v345
      %v347 = vpop.xlane.xlu0 %346
      %v348 = vsel %vm335, %v317, 0.0
      %349 = vadd.xlane.f32.xlu0 %v348
      %v350 = vpop.xlane.xlu0 %349
      %v351 = vsel %vm335, %v322, 0.0
      %352 = vadd.xlane.f32.xlu0 %v351
      %v353 = vpop.xlane.xlu0 %352
      %v354 = vsel %vm335, %v327, 0.0
      %355 = vadd.xlane.f32.xlu0 %v354
      %v356 = vpop.xlane.xlu0 %355
      %v357 = vsel %vm335, %v332, 0.0
      %358 = vadd.xlane.f32.xlu0 %v357
      %v359 = vpop.xlane.xlu0 %358
      %360 = vst.msk [vmem:[%s175] sm:$0xff] %vm194, %v338
      %361 = vst.msk [vmem:[%s175 + $0x8] sm:$0xff] %vm194, %v341
      %362 = vst.msk [vmem:[%s175 + $0x10] sm:$0xff] %vm194, %v344
      %363 = vst.msk [vmem:[%s175 + $0x18] sm:$0xff] %vm194, %v347
      %364 = vst.msk [vmem:[%s175 + $0x20] sm:$0xff] %vm194, %v350
      %365 = vst.msk [vmem:[%s175 + $0x28] sm:$0xff] %vm194, %v353
      %366 = vst.msk [vmem:[%s175 + $0x30] sm:$0xff] %vm194, %v356
      %367 = vst.msk [vmem:[%s175 + $0x38] sm:$0xff] %vm194, %v359
      %v368 = vmul.f32 %v297, %v297
      %v369 = vmul.f32 %v302, %v302
      %v370 = vmul.f32 %v307, %v307
      %v371 = vmul.f32 %v312, %v312
      %v372 = vmul.f32 %v317, %v317
      %v373 = vmul.f32 %v322, %v322
      %v374 = vmul.f32 %v327, %v327
      %v375 = vmul.f32 %v332, %v332
      %v376 = vsel %vm335, %v368, 0.0
      %377 = vadd.xlane.f32.xlu0 %v376
      %v378 = vpop.xlane.xlu0 %377
      %v379 = vsel %vm335, %v369, 0.0
      %380 = vadd.xlane.f32.xlu0 %v379
      %v381 = vpop.xlane.xlu0 %380
      %v382 = vsel %vm335, %v370, 0.0
      %383 = vadd.xlane.f32.xlu0 %v382
      %v384 = vpop.xlane.xlu0 %383
      %v385 = vsel %vm335, %v371, 0.0
      %386 = vadd.xlane.f32.xlu0 %v385
      %v387 = vpop.xlane.xlu0 %386
      %v388 = vsel %vm335, %v372, 0.0
      %389 = vadd.xlane.f32.xlu0 %v388
      %v390 = vpop.xlane.xlu0 %389
      %v391 = vsel %vm335, %v373, 0.0
      %392 = vadd.xlane.f32.xlu0 %v391
      %v393 = vpop.xlane.xlu0 %392
      %v394 = vsel %vm335, %v374, 0.0
      %395 = vadd.xlane.f32.xlu0 %v394
      %v396 = vpop.xlane.xlu0 %395
      %v397 = vsel %vm335, %v375, 0.0
      %398 = vadd.xlane.f32.xlu0 %v397
      %v399 = vpop.xlane.xlu0 %398
      %400 = vst.msk [vmem:[%s180] sm:$0xff] %vm194, %v378
      %401 = vst.msk [vmem:[%s180 + $0x8] sm:$0xff] %vm194, %v381
      %402 = vst.msk [vmem:[%s180 + $0x10] sm:$0xff] %vm194, %v384
      %403 = vst.msk [vmem:[%s180 + $0x18] sm:$0xff] %vm194, %v387
      %404 = vst.msk [vmem:[%s180 + $0x20] sm:$0xff] %vm194, %v390
      %405 = vst.msk [vmem:[%s180 + $0x28] sm:$0xff] %vm194, %v393
      %406 = vst.msk [vmem:[%s180 + $0x30] sm:$0xff] %vm194, %v396
      %407 = vst.msk [vmem:[%s180 + $0x38] sm:$0xff] %vm194, %v399
      %p408 = scmp.lt.s32.totalorder %s15, 1
      %s409 = scalar_select %p408, %s15, 1
      %s410 = smul.addr %s409, 8
      %s411 = smul.addr %s410, 8
      %s412 = scalar_lea.vmem %s2, %s411
      %p413 = scmp.lt.s32.totalorder %s15, 1
      %s414 = scalar_select %p413, %s15, 1
      %s415 = smul.addr %s414, 8
      %s416 = smul.addr %s415, 8
      %s417 = scalar_lea.vmem %s3, %s416
      // Predicated region
      $region29: #{deep_inverse_1d.2} parent=27 // pred_check
        %p418 = pneg %p80
      $region30: #{deep_inverse_1d.2} parent=27 // pred_check_branch
        %420 = sbr.rel (%p418) target = $region32
      $region31: #{deep_inverse_1d.2} parent=27 // pred_region
        _
      $region32: #{deep_inverse_1d.2} parent=27 // pred_fallthru
        _
      // Predicated region
      $region33: #{deep_inverse_1d.2} parent=27 // pred_check
        %p421 = pneg %p106
      $region34: #{deep_inverse_1d.2} parent=27 // pred_check_branch
        %423 = sbr.rel (%p421) target = $region36
      $region35: #{deep_inverse_1d.2} parent=27 // pred_region
        _
      $region36: #{deep_inverse_1d.2} parent=27 // pred_fallthru
        _
    $region28: #{deep_inverse_1d.2} parent=5 // pred_fallthru
      _
    %p424 = scmp.le.s32.totalorder 2, %s10
    // Predicated region
    $region37: #{deep_inverse_1d.2} parent=5 // pred_check
      %p425 = pneg %p424
    $region38: #{deep_inverse_1d.2} parent=5 // pred_check_branch
      %427 = sbr.rel (%p425) target = $region40
    $region39: #{deep_inverse_1d.2} parent=5 // pred_region
      %s428 = ssub.s32 %s10, 2
      // Predicated region
      $region41: #{deep_inverse_1d.2} parent=39 // pred_check
        %p429 = pneg %p86
      $region42: #{deep_inverse_1d.2} parent=39 // pred_check_branch
        %431 = sbr.rel (%p429) target = $region44
      $region43: #{deep_inverse_1d.2} parent=39 // pred_region
        %p432 = scmp.lt.s32.totalorder %s16, 1
        %s433 = scalar_select %p432, %s16, 1
        %s434 = smul.addr %s433, 8
        %s435 = smul.addr %s434, 8
        %s436 = scalar_lea.vmem %s2, %s435
      $region44: #{deep_inverse_1d.2} parent=39 // pred_fallthru
        _
      // Predicated region
      $region45: #{deep_inverse_1d.2} parent=39 // pred_check
        %p437 = pneg %p112
      $region46: #{deep_inverse_1d.2} parent=39 // pred_check_branch
        %439 = sbr.rel (%p437) target = $region48
      $region47: #{deep_inverse_1d.2} parent=39 // pred_region
        %p440 = scmp.lt.s32.totalorder %s16, 1
        %s441 = scalar_select %p440, %s16, 1
        %s442 = smul.addr %s441, 8
        %s443 = smul.addr %s442, 8
        %s444 = scalar_lea.vmem %s3, %s443
      $region48: #{deep_inverse_1d.2} parent=39 // pred_fallthru
        _
    $region40: #{deep_inverse_1d.2} parent=5 // pred_fallthru
      _
  $region6: #{deep_inverse_1d.2} parent=0 // loop_footer
    %s14 = sadd.s32 1, %s10
  $region7: #{deep_inverse_1d.2} parent=0 // loop_footer_branch
    %9 = sbr.rel target = $region3
  $region8: #{deep_inverse_1d.2} parent=0 // loop_exit
    _

// kernel: deep_inverse_1d.3
$region0: #{deep_inverse_1d.3}
  #allocation0 [shape = 'u32[]', space=smem, size = 0x4, offset = 0x4, fixed_abs, tag = 'smem constant byte address 0x4 - core index']
  #allocation1 [shape = 'u32[144,128]{1,0:T(1,128)}', space=vmem, size = 0x12000, scoped, tag = 'internal scratch']
  %s0 = inlined_call_operand.vmem [shape: f32[2,8,16], index: 0, kind: input, shape index: {}]
  %s1 = inlined_call_operand.vmem [shape: f32[64,24], index: 1, kind: input, shape index: {}]
  %s2 = inlined_call_operand.vmem [shape: f32[64,1], index: 2, kind: input, shape index: {}]
  %s3 = inlined_call_operand.vmem [shape: f32[64,1], index: 3, kind: input, shape index: {}]
  %s4 = inlined_call_operand.vmem [shape: f32[32,192], index: 4, kind: input, shape index: {}]
  %s5 = inlined_call_operand.vmem [shape: f32[32,1], index: 5, kind: input, shape index: {}]
  %s6 = inlined_call_operand.vmem [shape: f32[4,96], index: 6, kind: input, shape index: {}]
  %s7 = inlined_call_operand.vmem [shape: f32[4,1], index: 7, kind: input, shape index: {}]
  %s8 = inlined_call_operand.hbm [shape: f32[2,4,16], index: 8, kind: output, shape index: {}]
  %s9 = sld [smem:[#allocation0]]
  $region65: #{deep_inverse_1d.3} parent=0
    _
  %s11 = ssub.s32 1, %s9
  %s12 = scalar_select 0, %s11, %s9
  $region1: #{deep_inverse_1d.3} parent=0
    #allocation2 [shape = 'u8[4096]{0}', space=vmem, size = 0x1000, scoped, tag = 'output window, operand 0']
    #allocation3 [shape = 's32[2]{0}', space=sflag, size = 0x8, scoped, tag = 'scoped memory for deep_inverse_1d.3']
    %13 = vsyncpa [#allocation3], 0
    %s14 = scalar_lea.sflag [#allocation3], 1
    %15 = vsyncpa %s14, 0
    loop: start=0, step=1, limit=4
    $region2: #{deep_inverse_1d.3} parent=1 // loop_pre_header
      _
    $region3: #{deep_inverse_1d.3} parent=1 // loop_header
      %s17 = sphi 0, %s21
      %p18 = scmp.ge.s32.totalorder %s17, 4
      %s27 = sphi 0, %s29
      %s30 = sphi 0, %s27
      %s31 = sphi 0, %s30
      %s47 = sphi 0, %s31
      %s51 = sphi 0, %s51
      %s53 = sphi 0, %s51
      %s54 = sphi 0, %s53
      %s68 = sphi 0, %s54
      %s72 = sphi 0, %s72
      %s74 = sphi 0, %s72
      %s75 = sphi 0, %s74
      %s89 = sphi 0, %s75
      %s93 = sphi 0, %s93
      %s95 = sphi 0, %s93
      %s96 = sphi 0, %s95
      %s110 = sphi 0, %s96
      %s114 = sphi 0, %s114
      %s116 = sphi 0, %s114
      %s117 = sphi 0, %s116
      %s131 = sphi 0, %s117
      %s135 = sphi 0, %s135
      %s137 = sphi 0, %s135
      %s138 = sphi 0, %s137
      %s152 = sphi 0, %s138
      %s156 = sphi 0, %s156
      %s158 = sphi 0, %s156
      %s159 = sphi 0, %s158
      %s173 = sphi 0, %s159
      %s177 = sphi 0, %s177
      %s179 = sphi 0, %s177
      %s180 = sphi 0, %s179
      %s194 = sphi 0, %s180
      %s200 = sphi 0, %s202
      %s203 = sphi 0, %s200
      %s204 = sphi 0, %s203
      %s220 = sphi 0, %s204
    $region4: #{deep_inverse_1d.3} parent=1 // loop_header_branch
      %20 = sbr.rel (%p18) target = $region8
    $region5: #{deep_inverse_1d.3} parent=1 // loop_body
      %s22 = ssub.s32 %s17, 1
      %s23 = ssub.s32 %s17, 2
      %s24 = sadd.s32 %s17, 1
      %s25 = ssub.s32 %s17, %s24
      %p26 = scmp.eq.s32.totalorder %s25, 0
      %s28 = sadd.s32 %s27, 1
      %s29 = scalar_select %p26, %s27, %s28
      %p32 = pneg %p26
      %p33 = scmp.eq.s32.totalorder %s17, 1
      %p34 = por %p32, %p33
      %p35 = scmp.ne.s32.totalorder %s27, %s30
      %p36 = scmp.eq.s32.totalorder %s17, 0
      %p37 = por %p35, %p36
      %p38 = scmp.ne.s32.totalorder %s27, %s30
      %p39 = scmp.eq.s32.totalorder %s22, 1
      %p40 = por %p38, %p39
      %p41 = scmp.ne.s32.totalorder %s30, %s31
      %p42 = scmp.eq.s32.totalorder %s22, 0
      %p43 = por %p41, %p42
      %p44 = scmp.ne.s32.totalorder %s30, %s31
      %p45 = scmp.eq.s32.totalorder %s23, 1
      %p46 = por %p44, %p45
      %p48 = scmp.ne.s32.totalorder %s31, %s47
      %p49 = scmp.eq.s32.totalorder %s23, 0
      %p50 = por %p48, %p49
      %s52 = sadd.s32 %s51, 1
      %p55 = scmp.eq.s32.totalorder %s17, 1
      %p56 = scmp.ne.s32.totalorder %s51, %s53
      %p57 = scmp.eq.s32.totalorder %s17, 0
      %p58 = por %p56, %p57
      %p59 = scmp.ne.s32.totalorder %s51, %s53
      %p60 = scmp.eq.s32.totalorder %s22, 1
      %p61 = por %p59, %p60
      %p62 = scmp.ne.s32.totalorder %s53, %s54
      %p63 = scmp.eq.s32.totalorder %s22, 0
      %p64 = por %p62, %p63
      %p65 = scmp.ne.s32.totalorder %s53, %s54
      %p66 = scmp.eq.s32.totalorder %s23, 1
      %p67 = por %p65, %p66
      %p69 = scmp.ne.s32.totalorder %s54, %s68
      %p70 = scmp.eq.s32.totalorder %s23, 0
      %p71 = por %p69, %p70
      %s73 = sadd.s32 %s72, 1
      %p76 = scmp.eq.s32.totalorder %s17, 1
      %p77 = scmp.ne.s32.totalorder %s72, %s74
      %p78 = scmp.eq.s32.totalorder %s17, 0
      %p79 = por %p77, %p78
      %p80 = scmp.ne.s32.totalorder %s72, %s74
      %p81 = scmp.eq.s32.totalorder %s22, 1
      %p82 = por %p80, %p81
      %p83 = scmp.ne.s32.totalorder %s74, %s75
      %p84 = scmp.eq.s32.totalorder %s22, 0
      %p85 = por %p83, %p84
      %p86 = scmp.ne.s32.totalorder %s74, %s75
      %p87 = scmp.eq.s32.totalorder %s23, 1
      %p88 = por %p86, %p87
      %p90 = scmp.ne.s32.totalorder %s75, %s89
      %p91 = scmp.eq.s32.totalorder %s23, 0
      %p92 = por %p90, %p91
      %s94 = sadd.s32 %s93, 1
      %p97 = scmp.eq.s32.totalorder %s17, 1
      %p98 = scmp.ne.s32.totalorder %s93, %s95
      %p99 = scmp.eq.s32.totalorder %s17, 0
      %p100 = por %p98, %p99
      %p101 = scmp.ne.s32.totalorder %s93, %s95
      %p102 = scmp.eq.s32.totalorder %s22, 1
      %p103 = por %p101, %p102
      %p104 = scmp.ne.s32.totalorder %s95, %s96
      %p105 = scmp.eq.s32.totalorder %s22, 0
      %p106 = por %p104, %p105
      %p107 = scmp.ne.s32.totalorder %s95, %s96
      %p108 = scmp.eq.s32.totalorder %s23, 1
      %p109 = por %p107, %p108
      %p111 = scmp.ne.s32.totalorder %s96, %s110
      %p112 = scmp.eq.s32.totalorder %s23, 0
      %p113 = por %p111, %p112
      %s115 = sadd.s32 %s114, 1
      %p118 = scmp.eq.s32.totalorder %s17, 1
      %p119 = scmp.ne.s32.totalorder %s114, %s116
      %p120 = scmp.eq.s32.totalorder %s17, 0
      %p121 = por %p119, %p120
      %p122 = scmp.ne.s32.totalorder %s114, %s116
      %p123 = scmp.eq.s32.totalorder %s22, 1
      %p124 = por %p122, %p123
      %p125 = scmp.ne.s32.totalorder %s116, %s117
      %p126 = scmp.eq.s32.totalorder %s22, 0
      %p127 = por %p125, %p126
      %p128 = scmp.ne.s32.totalorder %s116, %s117
      %p129 = scmp.eq.s32.totalorder %s23, 1
      %p130 = por %p128, %p129
      %p132 = scmp.ne.s32.totalorder %s117, %s131
      %p133 = scmp.eq.s32.totalorder %s23, 0
      %p134 = por %p132, %p133
      %s136 = sadd.s32 %s135, 1
      %p139 = scmp.eq.s32.totalorder %s17, 1
      %p140 = scmp.ne.s32.totalorder %s135, %s137
      %p141 = scmp.eq.s32.totalorder %s17, 0
      %p142 = por %p140, %p141
      %p143 = scmp.ne.s32.totalorder %s135, %s137
      %p144 = scmp.eq.s32.totalorder %s22, 1
      %p145 = por %p143, %p144
      %p146 = scmp.ne.s32.totalorder %s137, %s138
      %p147 = scmp.eq.s32.totalorder %s22, 0
      %p148 = por %p146, %p147
      %p149 = scmp.ne.s32.totalorder %s137, %s138
      %p150 = scmp.eq.s32.totalorder %s23, 1
      %p151 = por %p149, %p150
      %p153 = scmp.ne.s32.totalorder %s138, %s152
      %p154 = scmp.eq.s32.totalorder %s23, 0
      %p155 = por %p153, %p154
      %s157 = sadd.s32 %s156, 1
      %p160 = scmp.eq.s32.totalorder %s17, 1
      %p161 = scmp.ne.s32.totalorder %s156, %s158
      %p162 = scmp.eq.s32.totalorder %s17, 0
      %p163 = por %p161, %p162
      %p164 = scmp.ne.s32.totalorder %s156, %s158
      %p165 = scmp.eq.s32.totalorder %s22, 1
      %p166 = por %p164, %p165
      %p167 = scmp.ne.s32.totalorder %s158, %s159
      %p168 = scmp.eq.s32.totalorder %s22, 0
      %p169 = por %p167, %p168
      %p170 = scmp.ne.s32.totalorder %s158, %s159
      %p171 = scmp.eq.s32.totalorder %s23, 1
      %p172 = por %p170, %p171
      %p174 = scmp.ne.s32.totalorder %s159, %s173
      %p175 = scmp.eq.s32.totalorder %s23, 0
      %p176 = por %p174, %p175
      %s178 = sadd.s32 %s177, 1
      %p181 = scmp.eq.s32.totalorder %s17, 1
      %p182 = scmp.ne.s32.totalorder %s177, %s179
      %p183 = scmp.eq.s32.totalorder %s17, 0
      %p184 = por %p182, %p183
      %p185 = scmp.ne.s32.totalorder %s177, %s179
      %p186 = scmp.eq.s32.totalorder %s22, 1
      %p187 = por %p185, %p186
      %p188 = scmp.ne.s32.totalorder %s179, %s180
      %p189 = scmp.eq.s32.totalorder %s22, 0
      %p190 = por %p188, %p189
      %p191 = scmp.ne.s32.totalorder %s179, %s180
      %p192 = scmp.eq.s32.totalorder %s23, 1
      %p193 = por %p191, %p192
      %p195 = scmp.ne.s32.totalorder %s180, %s194
      %p196 = scmp.eq.s32.totalorder %s23, 0
      %p197 = por %p195, %p196
      %s198 = ssub.s32 %s17, %s24
      %p199 = scmp.eq.s32.totalorder %s198, 0
      %s201 = sadd.s32 %s200, 1
      %s202 = scalar_select %p199, %s200, %s201
      %p205 = pneg %p199
      %p206 = scmp.eq.s32.totalorder %s17, 1
      %p207 = por %p205, %p206
      %p208 = scmp.ne.s32.totalorder %s200, %s203
      %p209 = scmp.eq.s32.totalorder %s17, 0
      %p210 = por %p208, %p209
      %p211 = scmp.ne.s32.totalorder %s200, %s203
      %p212 = scmp.eq.s32.totalorder %s22, 1
      %p213 = por %p211, %p212
      %p214 = scmp.ne.s32.totalorder %s203, %s204
      %p215 = scmp.eq.s32.totalorder %s22, 0
      %p216 = por %p214, %p215
      %p217 = scmp.ne.s32.totalorder %s203, %s204
      %p218 = scmp.eq.s32.totalorder %s23, 1
      %p219 = por %p217, %p218
      %p221 = scmp.ne.s32.totalorder %s204, %s220
      %p222 = scmp.eq.s32.totalorder %s23, 0
      %p223 = por %p221, %p222
      %p224 = scmp.le.s32.totalorder 1, %s17
      %p225 = scmp.lt.s32.totalorder %s17, 3
      %p226 = pnand %p224, %p225
      %p227 = pneg %p226
      // Predicated region
      $region9: #{deep_inverse_1d.3} parent=5 // pred_check
        _
      $region10: #{deep_inverse_1d.3} parent=5 // pred_check_branch
        %229 = sbr.rel (%p226) target = $region12
      $region11: #{deep_inverse_1d.3} parent=5 // pred_region
        %s230 = ssub.s32 %s17, 1
        // Predicated region
        $region13: #{deep_inverse_1d.3} parent=11 // pred_check
          %p231 = pneg %p64
        $region14: #{deep_inverse_1d.3} parent=11 // pred_check_branch
          %233 = sbr.rel (%p231) target = $region16
        $region15: #{deep_inverse_1d.3} parent=11 // pred_region
          _
        $region16: #{deep_inverse_1d.3} parent=11 // pred_fallthru
          _
        // Predicated region
        $region17: #{deep_inverse_1d.3} parent=11 // pred_check
          %p234 = pneg %p85
        $region18: #{deep_inverse_1d.3} parent=11 // pred_check_branch
          %236 = sbr.rel (%p234) target = $region20
        $region19: #{deep_inverse_1d.3} parent=11 // pred_region
          _
        $region20: #{deep_inverse_1d.3} parent=11 // pred_fallthru
          _
        // Predicated region
        $region21: #{deep_inverse_1d.3} parent=11 // pred_check
          %p237 = pneg %p106
        $region22: #{deep_inverse_1d.3} parent=11 // pred_check_branch
          %239 = sbr.rel (%p237) target = $region24
        $region23: #{deep_inverse_1d.3} parent=11 // pred_region
          _
        $region24: #{deep_inverse_1d.3} parent=11 // pred_fallthru
          _
        // Predicated region
        $region25: #{deep_inverse_1d.3} parent=11 // pred_check
          %p240 = pneg %p127
        $region26: #{deep_inverse_1d.3} parent=11 // pred_check_branch
          %242 = sbr.rel (%p240) target = $region28
        $region27: #{deep_inverse_1d.3} parent=11 // pred_region
          _
        $region28: #{deep_inverse_1d.3} parent=11 // pred_fallthru
          _
        // Predicated region
        $region29: #{deep_inverse_1d.3} parent=11 // pred_check
          %p243 = pneg %p148
        $region30: #{deep_inverse_1d.3} parent=11 // pred_check_branch
          %245 = sbr.rel (%p243) target = $region32
        $region31: #{deep_inverse_1d.3} parent=11 // pred_region
          _
        $region32: #{deep_inverse_1d.3} parent=11 // pred_fallthru
          _
        // Predicated region
        $region33: #{deep_inverse_1d.3} parent=11 // pred_check
          %p246 = pneg %p169
        $region34: #{deep_inverse_1d.3} parent=11 // pred_check_branch
          %248 = sbr.rel (%p246) target = $region36
        $region35: #{deep_inverse_1d.3} parent=11 // pred_region
          _
        $region36: #{deep_inverse_1d.3} parent=11 // pred_fallthru
          _
        // Predicated region
        $region37: #{deep_inverse_1d.3} parent=11 // pred_check
          %p249 = pneg %p190
        $region38: #{deep_inverse_1d.3} parent=11 // pred_check_branch
          %251 = sbr.rel (%p249) target = $region40
        $region39: #{deep_inverse_1d.3} parent=11 // pred_region
          _
        $region40: #{deep_inverse_1d.3} parent=11 // pred_fallthru
          _
      $region12: #{deep_inverse_1d.3} parent=5 // pred_fallthru
        _
      %p252 = scmp.lt.s32.totalorder %s17, 2
      // Predicated region
      $region41: #{deep_inverse_1d.3} parent=5 // pred_check
        %p253 = pneg %p252
      $region42: #{deep_inverse_1d.3} parent=5 // pred_check_branch
        %255 = sbr.rel (%p253) target = $region44
      $region43: #{deep_inverse_1d.3} parent=5 // pred_region
        // Predicated region
        $region45: #{deep_inverse_1d.3} parent=43 // pred_check
          %p256 = pneg %p37
        $region46: #{deep_inverse_1d.3} parent=43 // pred_check_branch
          %258 = sbr.rel (%p256) target = $region48
        $region47: #{deep_inverse_1d.3} parent=43 // pred_region
          %p259 = scmp.lt.s32.totalorder %s17, 1
          %s260 = scalar_select %p259, %s17, 1
          %s261 = smul.addr %s260, 8
          %s262 = scalar_lea.vmem %s0, %s261
        $region48: #{deep_inverse_1d.3} parent=43 // pred_fallthru
          _
      $region44: #{deep_inverse_1d.3} parent=5 // pred_fallthru
        _
      %p263 = scmp.le.s32.totalorder 1, %s17
      %p264 = scmp.lt.s32.totalorder %s17, 3
      %p265 = pnand %p263, %p264
      %p266 = pneg %p265
      // Predicated region
      $region49: #{deep_inverse_1d.3} parent=5 // pred_check
        _
      $region50: #{deep_inverse_1d.3} parent=5 // pred_check_branch
        %268 = sbr.rel (%p265) target = $region52
      $region51: #{deep_inverse_1d.3} parent=5 // pred_region
        %s269 = ssub.s32 %s17, 1
        %p270 = scmp.lt.s32.totalorder %s22, 1
        %s271 = scalar_select %p270, %s22, 1
        %s272 = smul.addr %s271, 8
        %s273 = scalar_lea.vmem %s0, %s272
        %p274 = pneg %p43
        %p275 = pneg %p40
        %p276 = pneg %p64
        %p277 = pneg %p61
        %p278 = pneg %p85
        %p279 = pneg %p82
        %p280 = pneg %p106
        %p281 = pneg %p103
        %p282 = pneg %p127
        %p283 = pneg %p124
        %p284 = pneg %p148
        %p285 = pneg %p145
        %p286 = pneg %p169
        %p287 = pneg %p166
        %p288 = pneg %p190
        %p289 = pneg %p187
        %p290 = pneg %p216
        %p291 = pneg %p213
        %s292 = sand.u32 %s203, 1
        %s293 = scalar_lea.sflag [#allocation3], %s292
        %s294 = sand.u32 %s203, 1
        %s295 = smul.addr %s294, 4
        %s296 = scalar_lea.vmem [#allocation2], %s295
        %p297 = scmp.lt.s32.totalorder %s22, 1
        %s298 = scalar_select %p297, %s22, 1
        %s299 = smul.addr %s298, 8
        %s300 = scalar_lea.vmem %s0, %s299
        %v301 = vld [vmem:[%s300] sm:$0xff]
        %v302 = vld [vmem:[%s1] sm:$0xff]
        %v303 = vld [vmem:[%s1 + $0x8] sm:$0xff]
        %v304 = vld [vmem:[%s1 + $0x10] sm:$0xff]
        %v305 = vld [vmem:[%s1 + $0x18] sm:$0xff]
        %v306 = vld [vmem:[%s1 + $0x20] sm:$0xff]
        %v307 = vld [vmem:[%s1 + $0x28] sm:$0xff]
        %v308 = vld [vmem:[%s1 + $0x30] sm:$0xff]
        %v309 = vld [vmem:[%s1 + $0x38] sm:$0xff]
        %311 = vrot.lane.b32.xlu0 %v301, 1
        %v312 = vpop.permute.xlu0 %311
        %vm314 = vcmask 7168
        %v315 = vsel %vm314, 0.0, %v312
        %vm316 = vcmask 138240
        %v317 = vsel %vm316, %v315, 0.0
        %319 = vrot.lane.b32.xlu0 %v317, 127
        %v320 = vpop.permute.xlu0 %319
        %322 = vrot.lane.b32.xlu0 %v317, 126
        %v323 = vpop.permute.xlu0 %322
        %vm325 = vcmask 195584
        %v327 = vsel %vm325, %v302, 0
        %v330 = vsel %vm325, %v303, 0
        %v333 = vsel %vm325, %v304, 0
        %v336 = vsel %vm325, %v305, 0
        %v339 = vsel %vm325, %v306, 0
        %v342 = vsel %vm325, %v307, 0
        %v345 = vsel %vm325, %v308, 0
        %v348 = vsel %vm325, %v309, 0
        %350 = vmatprep.subr.mxu0 0.0
        %351 = vmatpush1.msra.mxu0 0.0
        %352 = vmatprep.subr.mxu0 0.0
        %353 = vmatpush1.msra.mxu0 0.0
        %354 = vmatprep.subr.mxu0 0.0
        %355 = vmatpush1.msra.mxu0 0.0
        %356 = vmatprep.subr.mxu0 0.0
        %357 = vmatpush1.msra.mxu0 0.0
        %358 = vmatprep.subr.mxu0 0.0
        %359 = vmatpush1.msra.mxu0 0.0
        %360 = vmatprep.subr.mxu0 0.0
        %361 = vmatpush1.msra.mxu0 0.0
        %362 = vmatprep.subr.mxu0 0.0
        %363 = vmatpush1.msra.mxu0 0.0
        %364 = vmatprep.subr.mxu0 0.0
        %365 = vmatpush1.msra.mxu0 0.0
        %366 = vmatprep.subr.mxu0 0.0
        %367 = vmatpush1.msra.mxu0 0.0
        %368 = vmatprep.subr.mxu0 0.0
        %369 = vmatpush1.msra.mxu0 0.0
        %370 = vmatprep.subr.mxu0 0.0
        %371 = vmatpush1.msra.mxu0 0.0
        %372 = vmatprep.subr.mxu0 0.0
        %373 = vmatpush1.msra.mxu0 0.0
        %374 = vmatprep.subr.mxu0 0.0
        %375 = vmatpush1.msra.mxu0 0.0
        %376 = vmatprep.subr.mxu0 0.0
        %377 = vmatpush1.msra.mxu0 %v323
        %378 = vmatprep.subr.mxu0 0.0
        %379 = vmatpush1.msra.mxu0 %v320
        %380 = vmatprep.subr.mxu0 0.0
        %381 = vmatpush1.msra.mxu0 %v317
        %382 = vmatprep.subr.mxu0 0.0
        %383 = vmatpush2.msra.mxu0 0.0
        %384 = vmatprep.subr.mxu0 0.0
        %385 = vmatpush2.msra.mxu0 0.0
        %386 = vmatprep.subr.mxu0 0.0
        %387 = vmatpush2.msra.mxu0 0.0
        %388 = vmatprep.subr.mxu0 0.0
        %389 = vmatpush2.msra.mxu0 0.0
        %390 = vmatprep.subr.mxu0 0.0
        %391 = vmatpush2.msra.mxu0 0.0
        %392 = vmatprep.subr.mxu0 0.0
        %393 = vmatpush2.msra.mxu0 0.0
        %394 = vmatprep.subr.mxu0 0.0
        %395 = vmatpush2.msra.mxu0 0.0
        %396 = vmatprep.subr.mxu0 0.0
        %397 = vmatpush2.msra.mxu0 0.0
        %398 = vmatprep.subr.mxu0 0.0
        %399 = vmatpush2.msra.mxu0 0.0
        %400 = vmatprep.subr.mxu0 0.0
        %401 = vmatpush2.msra.mxu0 0.0
        %402 = vmatprep.subr.mxu0 0.0
        %403 = vmatpush2.msra.mxu0 0.0
        %404 = vmatprep.subr.mxu0 0.0
        %405 = vmatpush2.msra.mxu0 0.0
        %406 = vmatprep.subr.mxu0 0.0
        %407 = vmatpush2.msra.mxu0 0.0
        %408 = vmatprep.subr.mxu0 0.0
        %409 = vmatpush2.msra.mxu0 0.0
        %410 = vmatprep.subr.mxu0 0.0
        %411 = vmatpush2.msra.mxu0 0.0
        %412 = vmatprep.subr.mxu0 0.0
        %413 = vmatpush2.msra.mxu0 0.0
        %414 = vmatprep.mubr.f32.mxu0 0.0
        %415 = vmatmul.mubr.f32.gmra.mxu0 %v327
        %v416 = vpop.f32.mrf.mxu0
        %v417 = vadd.f32 0.0, %v416
        %v418 = vpop.f32.mrf.mxu0
        %419 = vmatprep.mubr.f32.mxu0 0.0
        %420 = vmatmul.mubr.f32.gmra.mxu0 %v330
        %v421 = vpop.f32.mrf.mxu0
        %v422 = vadd.f32 0.0, %v421
        %v423 = vpop.f32.mrf.mxu0
        %424 = vmatprep.mubr.f32.mxu0 0.0
        %425 = vmatmul.mubr.f32.gmra.mxu0 %v333
        %v426 = vpop.f32.mrf.mxu0
        %v427 = vadd.f32 0.0, %v426
        %v428 = vpop.f32.mrf.mxu0
        %429 = vmatprep.mubr.f32.mxu0 0.0
        %430 = vmatmul.mubr.f32.gmra.mxu0 %v336
        %v431 = vpop.f32.mrf.mxu0
        %v432 = vadd.f32 0.0, %v431
        %v433 = vpop.f32.mrf.mxu0
        %434 = vmatprep.mubr.f32.mxu0 0.0
        %435 = vmatmul.mubr.f32.gmra.mxu0 %v339
        %v436 = vpop.f32.mrf.mxu0
        %v437 = vadd.f32 0.0, %v436
        %v438 = vpop.f32.mrf.mxu0
        %439 = vmatprep.mubr.f32.mxu0 0.0
        %440 = vmatmul.mubr.f32.gmra.mxu0 %v342
        %v441 = vpop.f32.mrf.mxu0
        %v442 = vadd.f32 0.0, %v441
        %v443 = vpop.f32.mrf.mxu0
        %444 = vmatprep.mubr.f32.mxu0 0.0
        %445 = vmatmul.mubr.f32.gmra.mxu0 %v345
        %v446 = vpop.f32.mrf.mxu0
        %v447 = vadd.f32 0.0, %v446
        %v448 = vpop.f32.mrf.mxu0
        %449 = vmatprep.mubr.f32.mxu0 0.0
        %450 = vmatmul.mubr.f32.gmra.mxu0 %v348
        %v451 = vpop.f32.mrf.mxu0
        %v452 = vadd.f32 0.0, %v451
        %v453 = vpop.f32.mrf.mxu0
        %454 = vdwg.mxu0
        %v455 = vld [vmem:[%s2] sm:$0xff]
        %v456 = vld [vmem:[%s2 + $0x8] sm:$0xff]
        %v457 = vld [vmem:[%s2 + $0x10] sm:$0xff]
        %v458 = vld [vmem:[%s2 + $0x18] sm:$0xff]
        %v459 = vld [vmem:[%s2 + $0x20] sm:$0xff]
        %v460 = vld [vmem:[%s2 + $0x28] sm:$0xff]
        %v461 = vld [vmem:[%s2 + $0x30] sm:$0xff]
        %v462 = vld [vmem:[%s2 + $0x38] sm:$0xff]
        %464 = vset.pattern.permute.xlu0 0
        %465 = vperm.xlu0 %464, %v455
        %v466 = vpop.permute.xlu0 %465
        %469 = vset.pattern.permute.xlu0 0
        %470 = vperm.xlu0 %469, %v456
        %v471 = vpop.permute.xlu0 %470
        %474 = vset.pattern.permute.xlu0 0
        %475 = vperm.xlu0 %474, %v457
        %v476 = vpop.permute.xlu0 %475
        %479 = vset.pattern.permute.xlu0 0
        %480 = vperm.xlu0 %479, %v458
        %v481 = vpop.permute.xlu0 %480
        %484 = vset.pattern.permute.xlu0 0
        %485 = vperm.xlu0 %484, %v459
        %v486 = vpop.permute.xlu0 %485
        %489 = vset.pattern.permute.xlu0 0
        %490 = vperm.xlu0 %489, %v460
        %v491 = vpop.permute.xlu0 %490
        %494 = vset.pattern.permute.xlu0 0
        %495 = vperm.xlu0 %494, %v461
        %v496 = vpop.permute.xlu0 %495
        %499 = vset.pattern.permute.xlu0 0
        %500 = vperm.xlu0 %499, %v462
        %v501 = vpop.permute.xlu0 %500
        %v503 = vmul.f32 %v417, %v466
        %v504 = vmul.f32 %v422, %v471
        %v505 = vmul.f32 %v427, %v476
        %v506 = vmul.f32 %v432, %v481
        %v507 = vmul.f32 %v437, %v486
        %v508 = vmul.f32 %v442, %v491
        %v509 = vmul.f32 %v447, %v496
        %v510 = vmul.f32 %v452, %v501
        %v511 = vld [vmem:[%s3] sm:$0xff]
        %v512 = vld [vmem:[%s3 + $0x8] sm:$0xff]
        %v513 = vld [vmem:[%s3 + $0x10] sm:$0xff]
        %v514 = vld [vmem:[%s3 + $0x18] sm:$0xff]
        %v515 = vld [vmem:[%s3 + $0x20] sm:$0xff]
        %v516 = vld [vmem:[%s3 + $0x28] sm:$0xff]
        %v517 = vld [vmem:[%s3 + $0x30] sm:$0xff]
        %v518 = vld [vmem:[%s3 + $0x38] sm:$0xff]
        %520 = vset.pattern.permute.xlu0 0
        %521 = vperm.xlu0 %520, %v511
        %v522 = vpop.permute.xlu0 %521
        %525 = vset.pattern.permute.xlu0 0
        %526 = vperm.xlu0 %525, %v512
        %v527 = vpop.permute.xlu0 %526
        %530 = vset.pattern.permute.xlu0 0
        %531 = vperm.xlu0 %530, %v513
        %v532 = vpop.permute.xlu0 %531
        %535 = vset.pattern.permute.xlu0 0
        %536 = vperm.xlu0 %535, %v514
        %v537 = vpop.permute.xlu0 %536
        %540 = vset.pattern.permute.xlu0 0
        %541 = vperm.xlu0 %540, %v515
        %v542 = vpop.permute.xlu0 %541
        %545 = vset.pattern.permute.xlu0 0
        %546 = vperm.xlu0 %545, %v516
        %v547 = vpop.permute.xlu0 %546
        %550 = vset.pattern.permute.xlu0 0
        %551 = vperm.xlu0 %550, %v517
        %v552 = vpop.permute.xlu0 %551
        %555 = vset.pattern.permute.xlu0 0
        %556 = vperm.xlu0 %555, %v518
        %v557 = vpop.permute.xlu0 %556
        %v559 = vadd.f32 %v503, %v522
        %v560 = vadd.f32 %v504, %v527
        %v561 = vadd.f32 %v505, %v532
        %v562 = vadd.f32 %v506, %v537
        %v563 = vadd.f32 %v507, %v542
        %v564 = vadd.f32 %v508, %v547
        %v565 = vadd.f32 %v509, %v552
        %v566 = vadd.f32 %v510, %v557
        %v567 = vmax.f32 %v559, 0.0
        %v568 = vmax.f32 %v560, 0.0
        %v569 = vmax.f32 %v561, 0.0
        %v570 = vmax.f32 %v562, 0.0
        %v571 = vmax.f32 %v563, 0.0
        %v572 = vmax.f32 %v564, 0.0
        %v573 = vmax.f32 %v565, 0.0
        %v574 = vmax.f32 %v566, 0.0
        %v575 = vld [vmem:[%s4] sm:$0xff]
        %v576 = vld [vmem:[%s4 + $0x8] sm:$0xff]
        %v577 = vld [vmem:[%s4 + $0x10] sm:$0xff]
        %v578 = vld [vmem:[%s4 + $0x18] sm:$0xff]
        %v579 = vld [vmem:[%s4 + $0x20] sm:$0xff]
        %v580 = vld [vmem:[%s4 + $0x28] sm:$0xff]
        %v581 = vld [vmem:[%s4 + $0x30] sm:$0xff]
        %v582 = vld [vmem:[%s4 + $0x38] sm:$0xff]
        %591 = vrot.lane.b32.xlu0 %v567, 1
        %v592 = vpop.permute.xlu0 %591
        %593 = vrot.lane.b32.xlu0 %v568, 1
        %v594 = vpop.permute.xlu0 %593
        %595 = vrot.lane.b32.xlu0 %v569, 1
        %v596 = vpop.permute.xlu0 %595
        %597 = vrot.lane.b32.xlu0 %v570, 1
        %v598 = vpop.permute.xlu0 %597
        %599 = vrot.lane.b32.xlu0 %v571, 1
        %v600 = vpop.permute.xlu0 %599
        %601 = vrot.lane.b32.xlu0 %v572, 1
        %v602 = vpop.permute.xlu0 %601
        %603 = vrot.lane.b32.xlu0 %v573, 1
        %v604 = vpop.permute.xlu0 %603
        %605 = vrot.lane.b32.xlu0 %v574, 1
        %v606 = vpop.permute.xlu0 %605
        %v615 = vsel %vm314, 0.0, %v592
        %v616 = vsel %vm314, 0.0, %v594
        %v617 = vsel %vm314, 0.0, %v596
        %v618 = vsel %vm314, 0.0, %v598
        %v619 = vsel %vm314, 0.0, %v600
        %v620 = vsel %vm314, 0.0, %v602
        %v621 = vsel %vm314, 0.0, %v604
        %v622 = vsel %vm314, 0.0, %v606
        %v623 = vsel %vm316, %v615, 0.0
        %v624 = vsel %vm316, %v616, 0.0
        %v625 = vsel %vm316, %v617, 0.0
        %v626 = vsel %vm316, %v618, 0.0
        %v627 = vsel %vm316, %v619, 0.0
        %v628 = vsel %vm316, %v620, 0.0
        %v629 = vsel %vm316, %v621, 0.0
        %v630 = vsel %vm316, %v622, 0.0
        %639 = vrot.lane.b32.xlu0 %v623, 127
        %v640 = vpop.permute.xlu0 %639
        %641 = vrot.lane.b32.xlu0 %v624, 127
        %v642 = vpop.permute.xlu0 %641
        %643 = vrot.lane.b32.xlu0 %v625, 127
        %v644 = vpop.permute.xlu0 %643
        %645 = vrot.lane.b32.xlu0 %v626, 127
        %v646 = vpop.permute.xlu0 %645
        %647 = vrot.lane.b32.xlu0 %v627, 127
        %v648 = vpop.permute.xlu0 %647
        %649 = vrot.lane.b32.xlu0 %v628, 127
        %v650 = vpop.permute.xlu0 %649
        %651 = vrot.lane.b32.xlu0 %v629, 127
        %v652 = vpop.permute.xlu0 %651
        %653 = vrot.lane.b32.xlu0 %v630, 127
        %v654 = vpop.permute.xlu0 %653
        %663 = vrot.lane.b32.xlu0 %v623, 126
        %v664 = vpop.permute.xlu0 %663
        %665 = vrot.lane.b32.xlu0 %v624, 126
        %v666 = vpop.permute.xlu0 %665
        %667 = vrot.lane.b32.xlu0 %v625, 126
        %v668 = vpop.permute.xlu0 %667
        %669 = vrot.lane.b32.xlu0 %v626, 126
        %v670 = vpop.permute.xlu0 %669
        %671 = vrot.lane.b32.xlu0 %v627, 126
        %v672 = vpop.permute.xlu0 %671
        %673 = vrot.lane.b32.xlu0 %v628, 126
        %v674 = vpop.permute.xlu0 %673
        %675 = vrot.lane.b32.xlu0 %v629, 126
        %v676 = vpop.permute.xlu0 %675
        %677 = vrot.lane.b32.xlu0 %v630, 126
        %v678 = vpop.permute.xlu0 %677
        %v687 = vld [vmem:[%s5] sm:$0xff]
        %v688 = vld [vmem:[%s5 + $0x8] sm:$0xff]
        %v689 = vld [vmem:[%s5 + $0x10] sm:$0xff]
        %v690 = vld [vmem:[%s5 + $0x18] sm:$0xff]
        %692 = vset.pattern.permute.xlu0 0
        %693 = vperm.xlu0 %692, %v687
        %v694 = vpop.permute.xlu0 %693
        %697 = vset.pattern.permute.xlu0 0
        %698 = vperm.xlu0 %697, %v688
        %v699 = vpop.permute.xlu0 %698
        %702 = vset.pattern.permute.xlu0 0
        %703 = vperm.xlu0 %702, %v689
        %v704 = vpop.permute.xlu0 %703
        %707 = vset.pattern.permute.xlu0 0
        %708 = vperm.xlu0 %707, %v690
        %v709 = vpop.permute.xlu0 %708
        %vm711 = vcmask 523264
        %v713 = vsel %vm711, %v576, 0
        %v716 = vsel %vm711, %v578, 0
        %v719 = vsel %vm711, %v580, 0
        %v722 = vsel %vm711, %v582, 0
        %724 = vmatprep.subr.mxu0 0.0
        %725 = vmatpush1.msra.mxu0 %v654
        %726 = vmatprep.subr.mxu0 0.0
        %727 = vmatpush1.msra.mxu0 %v652
        %728 = vmatprep.subr.mxu0 0.0
        %729 = vmatpush1.msra.mxu0 %v650
        %730 = vmatprep.subr.mxu0 0.0
        %731 = vmatpush1.msra.mxu0 %v648
        %732 = vmatprep.subr.mxu0 0.0
        %733 = vmatpush1.msra.mxu0 %v646
        %734 = vmatprep.subr.mxu0 0.0
        %735 = vmatpush1.msra.mxu0 %v644
        %736 = vmatprep.subr.mxu0 0.0
        %737 = vmatpush1.msra.mxu0 %v642
        %738 = vmatprep.subr.mxu0 0.0
        %739 = vmatpush1.msra.mxu0 %v640
        %740 = vmatprep.subr.mxu0 0.0
        %741 = vmatpush1.msra.mxu0 %v630
        %742 = vmatprep.subr.mxu0 0.0
        %743 = vmatpush1.msra.mxu0 %v629
        %744 = vmatprep.subr.mxu0 0.0
        %745 = vmatpush1.msra.mxu0 %v628
        %746 = vmatprep.subr.mxu0 0.0
        %747 = vmatpush1.msra.mxu0 %v627
        %748 = vmatprep.subr.mxu0 0.0
        %749 = vmatpush1.msra.mxu0 %v626
        %750 = vmatprep.subr.mxu0 0.0
        %751 = vmatpush1.msra.mxu0 %v625
        %752 = vmatprep.subr.mxu0 0.0
        %753 = vmatpush1.msra.mxu0 %v624
        %754 = vmatprep.subr.mxu0 0.0
        %755 = vmatpush1.msra.mxu0 %v623
        %756 = vmatprep.subr.mxu0 0.0
        %757 = vmatpush2.msra.mxu0 0.0
        %758 = vmatprep.subr.mxu0 0.0
        %759 = vmatpush2.msra.mxu0 0.0
        %760 = vmatprep.subr.mxu0 0.0
        %761 = vmatpush2.msra.mxu0 0.0
        %762 = vmatprep.subr.mxu0 0.0
        %763 = vmatpush2.msra.mxu0 0.0
        %764 = vmatprep.subr.mxu0 0.0
        %765 = vmatpush2.msra.mxu0 0.0
        %766 = vmatprep.subr.mxu0 0.0
        %767 = vmatpush2.msra.mxu0 0.0
        %768 = vmatprep.subr.mxu0 0.0
        %769 = vmatpush2.msra.mxu0 0.0
        %770 = vmatprep.subr.mxu0 0.0
        %771 = vmatpush2.msra.mxu0 0.0
        %772 = vmatprep.subr.mxu0 0.0
        %773 = vmatpush2.msra.mxu0 %v678
        %774 = vmatprep.subr.mxu0 0.0
        %775 = vmatpush2.msra.mxu0 %v676
        %776 = vmatprep.subr.mxu0 0.0
        %777 = vmatpush2.msra.mxu0 %v674
        %778 = vmatprep.subr.mxu0 0.0
        %779 = vmatpush2.msra.mxu0 %v672
        %780 = vmatprep.subr.mxu0 0.0
        %781 = vmatpush2.msra.mxu0 %v670
        %782 = vmatprep.subr.mxu0 0.0
        %783 = vmatpush2.msra.mxu0 %v668
        %784 = vmatprep.subr.mxu0 0.0
        %785 = vmatpush2.msra.mxu0 %v666
        %786 = vmatprep.subr.mxu0 0.0
        %787 = vmatpush2.msra.mxu0 %v664
        %788 = vmatprep.mubr.f32.mxu0 %v713
        %789 = vmatmul.mubr.f32.gmra.mxu0 %v575
        %v790 = vpop.f32.mrf.mxu0
        %v791 = vadd.f32 %v694, %v790
        %v792 = vpop.f32.mrf.mxu0
        %793 = vmatprep.mubr.f32.mxu0 %v716
        %794 = vmatmul.mubr.f32.gmra.mxu0 %v577
        %v795 = vpop.f32.mrf.mxu0
        %v796 = vadd.f32 %v699, %v795
        %v797 = vpop.f32.mrf.mxu0
        %798 = vmatprep.mubr.f32.mxu0 %v719
        %799 = vmatmul.mubr.f32.gmra.mxu0 %v579
        %v800 = vpop.f32.mrf.mxu0
        %v801 = vadd.f32 %v704, %v800
        %v802 = vpop.f32.mrf.mxu0
        %803 = vmatprep.mubr.f32.mxu0 %v722
        %804 = vmatmul.mubr.f32.gmra.mxu0 %v581
        %v805 = vpop.f32.mrf.mxu0
        %v806 = vadd.f32 %v709, %v805
        %v807 = vpop.f32.mrf.mxu0
        %808 = vdwg.mxu0
        %v809 = vmax.f32 %v791, 0.0
        %v810 = vmax.f32 %v796, 0.0
        %v811 = vmax.f32 %v801, 0.0
        %v812 = vmax.f32 %v806, 0.0
        %v813 = vld [vmem:[%s6] sm:$0xf]
        %818 = vrot.lane.b32.xlu0 %v809, 1
        %v819 = vpop.permute.xlu0 %818
        %820 = vrot.lane.b32.xlu0 %v810, 1
        %v821 = vpop.permute.xlu0 %820
        %822 = vrot.lane.b32.xlu0 %v811, 1
        %v823 = vpop.permute.xlu0 %822
        %824 = vrot.lane.b32.xlu0 %v812, 1
        %v825 = vpop.permute.xlu0 %824
        %v830 = vsel %vm314, 0.0, %v819
        %v831 = vsel %vm314, 0.0, %v821
        %v832 = vsel %vm314, 0.0, %v823
        %v833 = vsel %vm314, 0.0, %v825
        %v834 = vsel %vm316, %v830, 0.0
        %v835 = vsel %vm316, %v831, 0.0
        %v836 = vsel %vm316, %v832, 0.0
        %v837 = vsel %vm316, %v833, 0.0
        %842 = vrot.lane.b32.xlu0 %v834, 127
        %v843 = vpop.permute.xlu0 %842
        %844 = vrot.lane.b32.xlu0 %v835, 127
        %v845 = vpop.permute.xlu0 %844
        %846 = vrot.lane.b32.xlu0 %v836, 127
        %v847 = vpop.permute.xlu0 %846
        %848 = vrot.lane.b32.xlu0 %v837, 127
        %v849 = vpop.permute.xlu0 %848
        %854 = vrot.lane.b32.xlu0 %v834, 126
        %v855 = vpop.permute.xlu0 %854
        %856 = vrot.lane.b32.xlu0 %v835, 126
        %v857 = vpop.permute.xlu0 %856
        %858 = vrot.lane.b32.xlu0 %v836, 126
        %v859 = vpop.permute.xlu0 %858
        %860 = vrot.lane.b32.xlu0 %v837, 126
        %v861 = vpop.permute.xlu0 %860
        %v866 = vld [vmem:[%s7] sm:$0xf]
        %868 = vset.pattern.permute.xlu0 0
        %869 = vperm.xlu0 %868, %v866
        %v870 = vpop.permute.xlu0 %869
        %vm872 = vcmask 785408
        %v874 = vsel %vm872, %v813, 0
        %876 = vmatprep.subr.mxu0 0.0
        %877 = vmatpush1.msra.mxu0 0.0
        %878 = vmatprep.subr.mxu0 0.0
        %879 = vmatpush1.msra.mxu0 0.0
        %880 = vmatprep.subr.mxu0 0.0
        %881 = vmatpush1.msra.mxu0 0.0
        %882 = vmatprep.subr.mxu0 0.0
        %883 = vmatpush1.msra.mxu0 0.0
        %884 = vmatprep.subr.mxu0 0.0
        %885 = vmatpush1.msra.mxu0 %v861
        %886 = vmatprep.subr.mxu0 0.0
        %887 = vmatpush1.msra.mxu0 %v859
        %888 = vmatprep.subr.mxu0 0.0
        %889 = vmatpush1.msra.mxu0 %v857
        %890 = vmatprep.subr.mxu0 0.0
        %891 = vmatpush1.msra.mxu0 %v855
        %892 = vmatprep.subr.mxu0 0.0
        %893 = vmatpush1.msra.mxu0 %v849
        %894 = vmatprep.subr.mxu0 0.0
        %895 = vmatpush1.msra.mxu0 %v847
        %896 = vmatprep.subr.mxu0 0.0
        %897 = vmatpush1.msra.mxu0 %v845
        %898 = vmatprep.subr.mxu0 0.0
        %899 = vmatpush1.msra.mxu0 %v843
        %900 = vmatprep.subr.mxu0 0.0
        %901 = vmatpush1.msra.mxu0 %v837
        %902 = vmatprep.subr.mxu0 0.0
        %903 = vmatpush1.msra.mxu0 %v836
        %904 = vmatprep.subr.mxu0 0.0
        %905 = vmatpush1.msra.mxu0 %v835
        %906 = vmatprep.subr.mxu0 0.0
        %907 = vmatpush1.msra.mxu0 %v834
        %908 = vmatprep.subr.mxu0 0.0
        %909 = vmatpush2.msra.mxu0 0.0
        %910 = vmatprep.subr.mxu0 0.0
        %911 = vmatpush2.msra.mxu0 0.0
        %912 = vmatprep.subr.mxu0 0.0
        %913 = vmatpush2.msra.mxu0 0.0
        %914 = vmatprep.subr.mxu0 0.0
        %915 = vmatpush2.msra.mxu0 0.0
        %916 = vmatprep.subr.mxu0 0.0
        %917 = vmatpush2.msra.mxu0 0.0
        %918 = vmatprep.subr.mxu0 0.0
        %919 = vmatpush2.msra.mxu0 0.0
        %920 = vmatprep.subr.mxu0 0.0
        %921 = vmatpush2.msra.mxu0 0.0
        %922 = vmatprep.subr.mxu0 0.0
        %923 = vmatpush2.msra.mxu0 0.0
        %924 = vmatprep.subr.mxu0 0.0
        %925 = vmatpush2.msra.mxu0 0.0
        %926 = vmatprep.subr.mxu0 0.0
        %927 = vmatpush2.msra.mxu0 0.0
        %928 = vmatprep.subr.mxu0 0.0
        %929 = vmatpush2.msra.mxu0 0.0
        %930 = vmatprep.subr.mxu0 0.0
        %931 = vmatpush2.msra.mxu0 0.0
        %932 = vmatprep.subr.mxu0 0.0
        %933 = vmatpush2.msra.mxu0 0.0
        %934 = vmatprep.subr.mxu0 0.0
        %935 = vmatpush2.msra.mxu0 0.0
        %936 = vmatprep.subr.mxu0 0.0
        %937 = vmatpush2.msra.mxu0 0.0
        %938 = vmatprep.subr.mxu0 0.0
        %939 = vmatpush2.msra.mxu0 0.0
        %940 = vmatprep.mubr.f32.mxu0 0.0
        %941 = vmatmul.mubr.f32.gmra.mxu0 %v874
        %v942 = vpop.f32.mrf.mxu0
        %v943 = vadd.f32 %v870, %v942
        %v944 = vpop.f32.mrf.mxu0
        %945 = vdwg.mxu0
        %vm946 = vcmask 125952
        %947 = vst.msk [vmem:[%s296] sm:$0xf] %vm946, %v943
        %s948 = sand.u32 %s203, 1
        %s949 = scalar_lea.sflag [#allocation3], %s948
        %s950 = sand.u32 %s203, 1
        %s951 = smul.addr %s950, 4
        %s952 = scalar_lea.vmem [#allocation2], %s951
        // Predicated region
        $region53: #{deep_inverse_1d.3} parent=51 // pred_check
          %p953 = pneg %p213
        $region54: #{deep_inverse_1d.3} parent=51 // pred_check_branch
          %955 = sbr.rel (%p953) target = $region56
        $region55: #{deep_inverse_1d.3} parent=51 // pred_region
          %s957 = ssub.s32 64, 64
          %958 = vsyncadd %s949, %s957
          %s959 = smul.addr %s22, 64
          %s960 = scalar_lea.hbm %s8, %s959
          %s962 = sshll.u32 %s952, 4
          %s963 = int_to_ptr.vmem [resolvable:$true] %s962
          %965 = dma.vmem_to_hbm [thread:$0]  %s963, 64, %s960, %s949
        $region56: #{deep_inverse_1d.3} parent=51 // pred_fallthru
          _
      $region52: #{deep_inverse_1d.3} parent=5 // pred_fallthru
        _
      %p966 = scmp.le.s32.totalorder 2, %s17
      // Predicated region
      $region57: #{deep_inverse_1d.3} parent=5 // pred_check
        %p967 = pneg %p966
      $region58: #{deep_inverse_1d.3} parent=5 // pred_check_branch
        %969 = sbr.rel (%p967) target = $region60
      $region59: #{deep_inverse_1d.3} parent=5 // pred_region
        %s970 = ssub.s32 %s17, 2
        // Predicated region
        $region61: #{deep_inverse_1d.3} parent=59 // pred_check
          %p971 = pneg %p219
        $region62: #{deep_inverse_1d.3} parent=59 // pred_check_branch
          %973 = sbr.rel (%p971) target = $region64
        $region63: #{deep_inverse_1d.3} parent=59 // pred_region
          %s974 = sand.u32 %s204, 1
          %s975 = scalar_lea.sflag [#allocation3], %s974
          %s976 = sand.u32 %s204, 1
          %s977 = smul.addr %s976, 4
          %s978 = scalar_lea.vmem [#allocation2], %s977
          %979 = dma.done %s975, 64
        $region64: #{deep_inverse_1d.3} parent=59 // pred_fallthru
          _
      $region60: #{deep_inverse_1d.3} parent=5 // pred_fallthru
        _
    $region6: #{deep_inverse_1d.3} parent=1 // loop_footer
      %s21 = sadd.s32 1, %s17
    $region7: #{deep_inverse_1d.3} parent=1 // loop_footer_branch
      %16 = sbr.rel target = $region3
    $region8: #{deep_inverse_1d.3} parent=1 // loop_exit
      _
    %980 = vsyncpa [#allocation3], 1
    %s981 = scalar_lea.sflag [#allocation3], 1
    %982 = vsyncpa %s981, 1

</llo_original>
